<compile_context>
chip_gen: v7x
topology: tpu7x:2x2x1
jax: 0.10.0
libtpu: 0.0.40
codegen_flags: <defaults>
</compile_context>

<pallas_src>
import jax
import jax.numpy as jnp
from jax import lax
from jax.experimental import pallas as pl
from jax.experimental.pallas import tpu as pltpu


def decoder_kernel(src_ref, emb_ref, hid_ref, enc_ref, mask_ref,
                   Wh_ref, We_ref, Ww_ref, Wemb_ref, wih1_ref, whh0_ref, fcWo_ref,
                   av_ref, pv_ref, ab_ref, pb_ref,
                   bih0_ref, bhh0_ref, bih1_ref, bhh1_ref, fcb_ref,
                   pgb_ref,
                   pred_ref, hidout_ref, att_ref):
    B, L, E2 = enc_ref.shape
    H = hid_ref.shape[2]
    V = pred_ref.shape[1]
    f32, bf16 = jnp.float32, jnp.bfloat16

    h_first = hid_ref[0]               # [B, H] f32
    h_last = hid_ref[1]                # [B, H] f32
    enc = enc_ref[...]                 # [B, L, E2] f32
    mask = mask_ref[...]               # [B, L] f32
    emb = emb_ref[...]                 # [B, E] bf16

    # ---- fused h_last projection: [att_h | ptr_h | whh1 | p_gen_h] in one MXU push ----
    hproj = jnp.dot(h_last.astype(bf16), Wh_ref[...], preferred_element_type=f32)  # [B, 5H+1]
    part_h_att = hproj[:, 0:H]
    part_h_ptr = hproj[:, H:2 * H]
    gh1 = hproj[:, 2 * H:5 * H] + bhh1_ref[0][None, :]          # GRU layer-1 hidden gates
    pg_h = hproj[:, 5 * H:5 * H + 1]

    # ---- single pass of encoder outputs through the MXU for both attention heads ----
    eproj = jnp.dot(enc.reshape(B * L, E2).astype(bf16), We_ref[...],
                    preferred_element_type=f32).reshape(B, L, 2 * H)

    def masked_attention(part_e, part_h, b, v):
        energy = jnp.tanh(part_e + part_h[:, None, :] + b[0][None, None, :])   # [B, L, H] f32
        # lane reduce on the VPU/XLU instead of an N=1 matmul + reshape round trip
        scores = jnp.sum(energy * v[0][None, None, :], axis=-1)                # [B, L]
        scores = jnp.where(mask != 0.0, scores, -1e10)
        m = jnp.max(scores, axis=1, keepdims=True)
        e = jnp.exp(scores - m)
        return e / jnp.sum(e, axis=1, keepdims=True)

    att = masked_attention(eproj[:, :, 0:H], part_h_att, ab_ref[...], av_ref[...])   # [B, L]
    patt = masked_attention(eproj[:, :, H:2 * H], part_h_ptr, pb_ref[...], pv_ref[...])

    # ---- weighted context vector: bmm(att.unsqueeze(1), enc) ----
    weighted = jnp.sum(att[:, :, None] * enc, axis=1)                                # [B, E2] f32

    # ---- fused `weighted` projection: [gru0_in | p_gen_w | fc_w] ----
    wproj = jnp.dot(weighted.astype(bf16), Ww_ref[...], preferred_element_type=f32)  # [B, 3H+1+V]
    gi0_w = wproj[:, 0:3 * H]
    pg_w = wproj[:, 3 * H:3 * H + 1]
    fc_w = wproj[:, 3 * H + 1:]

    # ---- fused embedding projection: [gru0_in | fc_e] ----
    eproj2 = jnp.dot(emb, Wemb_ref[...], preferred_element_type=f32)                 # [B, 3H+V]
    gi0_e = eproj2[:, 0:3 * H]
    fc_e = eproj2[:, 3 * H:]

    # ---- p_gen gate (scalar bias from SMEM) ----
    p_gen = jax.nn.sigmoid(pg_w + pg_h + pgb_ref[0, 0])                              # [B, 1]

    # ---- 2-layer GRU, single time step (PyTorch gate order r, z, n) ----
    def gru_gates(gi, gh, h):
        r = jax.nn.sigmoid(gi[:, 0:H] + gh[:, 0:H])
        z = jax.nn.sigmoid(gi[:, H:2 * H] + gh[:, H:2 * H])
        n = jnp.tanh(gi[:, 2 * H:3 * H] + r * gh[:, 2 * H:3 * H])
        return (1.0 - z) * n + z * h

    gi0 = gi0_w + gi0_e + bih0_ref[0][None, :]
    gh0 = (jnp.dot(h_first.astype(bf16), whh0_ref[...], preferred_element_type=f32)
           + bhh0_ref[0][None, :])
    h0_new = gru_gates(gi0, gh0, h_first)

    gi1 = (jnp.dot(h0_new.astype(bf16), wih1_ref[...], preferred_element_type=f32)
           + bih1_ref[0][None, :])
    h1_new = gru_gates(gi1, gh1, h_last)

    # ---- generator distribution (raw fc logits, per the PyTorch spec) ----
    prediction = (jnp.dot(h1_new.astype(bf16), fcWo_ref[...], preferred_element_type=f32)
                  + fc_w + fc_e + fcb_ref[0][None, :])                               # [B, V]

    # ---- pointer distribution: scatter_add(1, src, patt) streamed over L (no [B,L,V] one-hot) ----
    src = src_ref[...]                                                               # [B, L] int32
    vocab_iota = lax.broadcasted_iota(jnp.int32, (B, V), 1)
    pointer_pred = jnp.zeros((B, V), f32)
    for l in range(L):                              # L is a small static trip-count
        hit = (src[:, l:l + 1] == vocab_iota).astype(f32)
        pointer_pred = pointer_pred + patt[:, l:l + 1] * hit

    pred_ref[...] = prediction * (1.0 - p_gen) + pointer_pred * p_gen
    hidout_ref[0] = h0_new
    hidout_ref[1] = h1_new
    att_ref[...] = att


def make_params(key, V, E, Henc, H):
    E2 = 2 * Henc

    def nrm(k, shape, scale=0.1):
        return (scale * jax.random.normal(k, shape)).astype(jnp.float32)

    ks = jax.random.split(key, 19)
    return dict(
        emb_table=nrm(ks[0], (V, E)),
        # attention: Linear(E2 + H, H) stored transposed, then v: Linear(H, 1, bias=False)
        aW=nrm(ks[1], (H + E2, H)), ab=nrm(ks[2], (1, H)), av=nrm(ks[3], (H, 1)),
        pW=nrm(ks[4], (H + E2, H)), pb=nrm(ks[5], (1, H)), pv=nrm(ks[6], (H, 1)),
        # GRU layer 0 (input E2 + E) and layer 1 (input H), weights transposed for x @ W^T
        wih0=nrm(ks[7], (E2 + E, 3 * H)), whh0=nrm(ks[8], (H, 3 * H)),
        bih0=nrm(ks[9], (1, 3 * H)), bhh0=nrm(ks[10], (1, 3 * H)),
        wih1=nrm(ks[11], (H, 3 * H)), whh1=nrm(ks[12], (H, 3 * H)),
        bih1=nrm(ks[13], (1, 3 * H)), bhh1=nrm(ks[14], (1, 3 * H)),
        # fc: Linear(H + E2 + E, V) (rows ordered [output | weighted | emb]), p_gen: Linear(E2 + H, 1)
        fcW=nrm(ks[15], (H + E2 + E, V)), fcb=nrm(ks[16], (1, V)),
        pgW=nrm(ks[17], (E2 + H, 1)), pgb=nrm(ks[18], (1, 1)),
    )


def prepare_weights(params):
    """One-time fusion/cast of weights so the kernel issues few, wide bf16 MXU pushes."""
    bf16 = jnp.bfloat16
    H = params["whh0"].shape[0]
    E2 = params["aW"].shape[0] - H
    aW, pW, wih0, fcW, pgW = (params[k] for k in ("aW", "pW", "wih0", "fcW", "pgW"))
    return dict(
        Wh=jnp.concatenate([aW[:H], pW[:H], params["whh1"], pgW[E2:]], axis=1).astype(bf16),
        We=jnp.concatenate([aW[H:], pW[H:]], axis=1).astype(bf16),
        Ww=jnp.concatenate([wih0[:E2], pgW[:E2], fcW[H:H + E2]], axis=1).astype(bf16),
        Wemb=jnp.concatenate([wih0[E2:], fcW[H + E2:]], axis=1).astype(bf16),
        wih1=params["wih1"].astype(bf16),
        whh0=params["whh0"].astype(bf16),
        fcWo=fcW[:H].astype(bf16),
        av=params["av"].reshape(1, H), pv=params["pv"].reshape(1, H),
        ab=params["ab"], pb=params["pb"],
        bih0=params["bih0"], bhh0=params["bhh0"],
        bih1=params["bih1"], bhh1=params["bhh1"],
        fcb=params["fcb"], pgb=params["pgb"],
        emb_table=params["emb_table"],
    )


def decoder_forward(w, src, inp, hidden, encoder_outputs, mask, *, batch_tile=8):
    """src: [L, B] int32, inp: [B] int32, hidden: [2, B, H] f32,
    encoder_outputs: [L, B, 2*Henc] f32, mask: [B, L]."""
    L, B = src.shape
    H = hidden.shape[2]
    E2 = encoder_outputs.shape[2]
    V = w["fcb"].shape[1]
    E = w["emb_table"].shape[1]

    embedded = jnp.take(w["emb_table"], inp, axis=0).astype(jnp.bfloat16)   # [B, E]  (glue gather)
    enc_bt = jnp.transpose(encoder_outputs, (1, 0, 2)).astype(jnp.float32)  # [B, L, E2]
    src_bt = jnp.transpose(src, (1, 0)).astype(jnp.int32)                   # [B, L]
    mask_f = mask.astype(jnp.float32)
    hidden_p = hidden.astype(jnp.float32)

    BT = batch_tile
    Bp = pl.cdiv(B, BT) * BT
    pad = Bp - B
    if pad:
        src_bt = jnp.pad(src_bt, ((0, pad), (0, 0)))
        embedded = jnp.pad(embedded, ((0, pad), (0, 0)))
        hidden_p = jnp.pad(hidden_p, ((0, 0), (0, pad), (0, 0)))
        enc_bt = jnp.pad(enc_bt, ((0, pad), (0, 0), (0, 0)))
        mask_f = jnp.pad(mask_f, ((0, pad), (0, 0)), constant_values=1.0)

    row_map = lambda i: (i, 0)
    fixed2 = lambda i: (0, 0)
    weight_keys = ["Wh", "We", "Ww", "Wemb", "wih1", "whh0", "fcWo",
                   "av", "pv", "ab", "pb", "bih0", "bhh0", "bih1", "bhh1", "fcb"]

    in_specs = [
        pl.BlockSpec((BT, L), row_map),                       # src
        pl.BlockSpec((BT, E), row_map),                       # embedded
        pl.BlockSpec((2, BT, H), lambda i: (0, i, 0)),        # hidden
        pl.BlockSpec((BT, L, E2), lambda i: (i, 0, 0)),       # encoder outputs
        pl.BlockSpec((BT, L), row_map),                       # mask
    ]
    # weights: full block, constant index_map -> stay resident in VMEM across batch tiles
    in_specs += [pl.BlockSpec(w[k].shape, fixed2) for k in weight_keys]
    # true scalar bias lives in SMEM
    in_specs.append(pl.BlockSpec(memory_space=pltpu.MemorySpace.SMEM))       # pgb

    out_specs = [
        pl.BlockSpec((BT, V), row_map),                       # prediction
        pl.BlockSpec((2, BT, H), lambda i: (0, i, 0)),        # new hidden
        pl.BlockSpec((BT, L), row_map),                       # attention
    ]
    out_shape = (
        jax.ShapeDtypeStruct((Bp, V), jnp.float32),
        jax.ShapeDtypeStruct((2, Bp, H), jnp.float32),
        jax.ShapeDtypeStruct((Bp, L), jnp.float32),
    )

    fn = pl.pallas_call(
        decoder_kernel,
        out_shape=out_shape,
        grid_spec=pltpu.PrefetchScalarGridSpec(
            num_scalar_prefetch=0,
            grid=(Bp // BT,),
            in_specs=in_specs,
            out_specs=out_specs,
        ),
        compiler_params=pltpu.CompilerParams(
            dimension_semantics=("parallel",),          # batch tiles shard across TCs (v7x)
            vmem_limit_bytes=32 * 1024 * 1024,
        ),
    )
    pred, hid_out, att = fn(src_bt, embedded, hidden_p, enc_bt, mask_f,
                            *[w[k] for k in weight_keys], w["pgb"])
    return pred[:B], hid_out[:, :B], att[:B]


def decoder_reference(params, src, inp, hidden, encoder_outputs, mask):
    """Pure-JAX f32 reference (unfused), mirroring the PyTorch forward."""
    L, B = src.shape
    H = hidden.shape[2]
    E2 = encoder_outputs.shape[2]
    emb = jnp.take(params["emb_table"], inp, axis=0)
    enc = jnp.transpose(encoder_outputs, (1, 0, 2))
    src_bt = jnp.transpose(src, (1, 0))
    h_first, h_last = hidden[0], hidden[1]
    enc2d = enc.reshape(B * L, E2)

    def bahdanau(Wt, b, v):
        part_h = h_last @ Wt[:H]
        part_e = (enc2d @ Wt[H:]).reshape(B, L, H)
        energy = jnp.tanh(part_e + part_h[:, None, :] + b[0][None, None, :])
        scores = (energy.reshape(B * L, H) @ v).reshape(B, L)
        scores = jnp.where(mask != 0.0, scores, -1e10)
        return jax.nn.softmax(scores, axis=1)

    att = bahdanau(params["aW"], params["ab"], params["av"])
    patt = bahdanau(params["pW"], params["pb"], params["pv"])
    weighted = jnp.sum(att[:, :, None] * enc, axis=1)
    p_gen = jax.nn.sigmoid(jnp.concatenate([weighted, h_last], 1) @ params["pgW"] + params["pgb"])

    def gru_cell(x, h, wih, whh, bih, bhh):
        gi = x @ wih + bih[0]
        gh = h @ whh + bhh[0]
        r = jax.nn.sigmoid(gi[:, :H] + gh[:, :H])
        z = jax.nn.sigmoid(gi[:, H:2 * H] + gh[:, H:2 * H])
        n = jnp.tanh(gi[:, 2 * H:] + r * gh[:, 2 * H:])
        return (1 - z) * n + z * h

    x0 = jnp.concatenate([weighted, emb], 1)
    h0 = gru_cell(x0, h_first, params["wih0"], params["whh0"], params["bih0"], params["bhh0"])
    h1 = gru_cell(h0, h_last, params["wih1"], params["whh1"], params["bih1"], params["bhh1"])
    pred_in = jnp.concatenate([h1, weighted, emb], 1)
    prediction = pred_in @ params["fcW"] + params["fcb"][0]
    V = prediction.shape[1]
    onehot = jax.nn.one_hot(src_bt, V, dtype=jnp.float32)
    pointer = jnp.einsum("bl,blv->bv", patt, onehot)
    pred = prediction * (1 - p_gen) + pointer * p_gen
    return pred, jnp.stack([h0, h1]), att


if __name__ == "__main__":
    key = jax.random.PRNGKey(0)
    B, L = 8, 16                      # batch (sublane-aligned), source length
    Henc, E, H, V = 16, 16, 32, 64    # enc_hid_dim, emb_dim, dec_hid_dim, output_dim

    kp, k1, k2, k3, k4 = jax.random.split(key, 5)
    params = make_params(kp, V, E, Henc, H)
    fused = prepare_weights(params)

    src = jax.random.randint(k1, (L, B), 0, V, dtype=jnp.int32)           # [src_len, batch]
    inp = jax.random.randint(k2, (B,), 0, V, dtype=jnp.int32)             # [batch]
    hidden = (0.1 * jax.random.normal(k3, (2, B, H))).astype(jnp.float32)
    enc_out = (0.1 * jax.random.normal(k4, (L, B, 2 * Henc))).astype(jnp.float32)
    mask = jnp.ones((B, L), dtype=jnp.float32).at[0, L - 2:].set(0.0)

    prediction, hidden_out, attention = decoder_forward(fused, src, inp, hidden, enc_out, mask)
    jax.block_until_ready((prediction, hidden_out, attention))

    # correctness vs pure-JAX f32 reference (bf16 matmul operands -> loose tolerance)
    pred_ref, hid_ref_, att_ref_ = decoder_reference(params, src, inp, hidden, enc_out, mask)
    assert prediction.shape == (B, V)
    assert hidden_out.shape == (2, B, H)
    assert attention.shape == (B, L)
    assert bool(jnp.all(jnp.isfinite(prediction)))
    assert bool(jnp.allclose(prediction, pred_ref, atol=2e-2, rtol=2e-2))
    assert bool(jnp.allclose(hidden_out, hid_ref_, atol=2e-2, rtol=2e-2))
    assert bool(jnp.allclose(attention, att_ref_, atol=2e-2, rtol=2e-2))
    print("KERNEL_OK")
</pallas_src>

<mosaic_0001>
module attributes {stable_mosaic.version = 11 : i64} {
  func.func @decoder_kernel(%arg0: i32, %arg1: memref<8x16xi32, #tpu.memory_space<vmem>>, %arg2: memref<8x16xbf16, #tpu.memory_space<vmem>>, %arg3: memref<2x8x32xf32, #tpu.memory_space<vmem>>, %arg4: memref<8x16x32xf32, #tpu.memory_space<vmem>>, %arg5: memref<8x16xf32, #tpu.memory_space<vmem>>, %arg6: memref<32x161xbf16, #tpu.memory_space<vmem>>, %arg7: memref<32x64xbf16, #tpu.memory_space<vmem>>, %arg8: memref<32x161xbf16, #tpu.memory_space<vmem>>, %arg9: memref<16x160xbf16, #tpu.memory_space<vmem>>, %arg10: memref<32x96xbf16, #tpu.memory_space<vmem>>, %arg11: memref<32x96xbf16, #tpu.memory_space<vmem>>, %arg12: memref<32x64xbf16, #tpu.memory_space<vmem>>, %arg13: memref<1x32xf32, #tpu.memory_space<vmem>>, %arg14: memref<1x32xf32, #tpu.memory_space<vmem>>, %arg15: memref<1x32xf32, #tpu.memory_space<vmem>>, %arg16: memref<1x32xf32, #tpu.memory_space<vmem>>, %arg17: memref<1x96xf32, #tpu.memory_space<vmem>>, %arg18: memref<1x96xf32, #tpu.memory_space<vmem>>, %arg19: memref<1x96xf32, #tpu.memory_space<vmem>>, %arg20: memref<1x96xf32, #tpu.memory_space<vmem>>, %arg21: memref<1x64xf32, #tpu.memory_space<vmem>>, %arg22: memref<1x1xf32, #tpu.memory_space<smem>>, %arg23: memref<8x64xf32, #tpu.memory_space<vmem>>, %arg24: memref<2x8x32xf32, #tpu.memory_space<vmem>>, %arg25: memref<8x16xf32, #tpu.memory_space<vmem>>) attributes {dimension_semantics = [#tpu.dimension_semantics<parallel>], iteration_bounds = array<i64: 1>, scalar_prefetch = 0 : i64, scratch_operands = 0 : i64, tpu.core_type = #tpu.core_type<tc>, window_params = [{transform_indices = @transform_0, window_bounds = array<i64: 8, 16>}, {transform_indices = @transform_1, window_bounds = array<i64: 8, 16>}, {transform_indices = @transform_2, window_bounds = array<i64: 2, 8, 32>}, {transform_indices = @transform_3, window_bounds = array<i64: 8, 16, 32>}, {transform_indices = @transform_4, window_bounds = array<i64: 8, 16>}, {pipeline_mode = #tpu.pipeline_mode<synchronous>, transform_indices = @transform_5, window_bounds = array<i64: 32, 161>}, {pipeline_mode = #tpu.pipeline_mode<synchronous>, transform_indices = @transform_6, window_bounds = array<i64: 32, 64>}, {pipeline_mode = #tpu.pipeline_mode<synchronous>, transform_indices = @transform_7, window_bounds = array<i64: 32, 161>}, {pipeline_mode = #tpu.pipeline_mode<synchronous>, transform_indices = @transform_8, window_bounds = array<i64: 16, 160>}, {pipeline_mode = #tpu.pipeline_mode<synchronous>, transform_indices = @transform_9, window_bounds = array<i64: 32, 96>}, {pipeline_mode = #tpu.pipeline_mode<synchronous>, transform_indices = @transform_10, window_bounds = array<i64: 32, 96>}, {pipeline_mode = #tpu.pipeline_mode<synchronous>, transform_indices = @transform_11, window_bounds = array<i64: 32, 64>}, {pipeline_mode = #tpu.pipeline_mode<synchronous>, transform_indices = @transform_12, window_bounds = array<i64: 1, 32>}, {pipeline_mode = #tpu.pipeline_mode<synchronous>, transform_indices = @transform_13, window_bounds = array<i64: 1, 32>}, {pipeline_mode = #tpu.pipeline_mode<synchronous>, transform_indices = @transform_14, window_bounds = array<i64: 1, 32>}, {pipeline_mode = #tpu.pipeline_mode<synchronous>, transform_indices = @transform_15, window_bounds = array<i64: 1, 32>}, {pipeline_mode = #tpu.pipeline_mode<synchronous>, transform_indices = @transform_16, window_bounds = array<i64: 1, 96>}, {pipeline_mode = #tpu.pipeline_mode<synchronous>, transform_indices = @transform_17, window_bounds = array<i64: 1, 96>}, {pipeline_mode = #tpu.pipeline_mode<synchronous>, transform_indices = @transform_18, window_bounds = array<i64: 1, 96>}, {pipeline_mode = #tpu.pipeline_mode<synchronous>, transform_indices = @transform_19, window_bounds = array<i64: 1, 96>}, {pipeline_mode = #tpu.pipeline_mode<synchronous>, transform_indices = @transform_20, window_bounds = array<i64: 1, 64>}, {transform_indices = @transform_21, window_bounds = array<i64: 1, 1>}, {transform_indices = @transform_22, window_bounds = array<i64: 8, 64>}, {transform_indices = @transform_23, window_bounds = array<i64: 2, 8, 32>}, {transform_indices = @transform_24, window_bounds = array<i64: 8, 16>}]} {
    %c0 = arith.constant 0 : index
    %c0_0 = arith.constant 0 : index
    %c0_1 = arith.constant 0 : index
    %0 = vector.load %arg3[%c0, %c0_0, %c0_1] : memref<2x8x32xf32, #tpu.memory_space<vmem>>, vector<1x8x32xf32>
    %1 = vector.shape_cast %0 : vector<1x8x32xf32> to vector<8x32xf32>
    %c1 = arith.constant 1 : index
    %c0_2 = arith.constant 0 : index
    %c0_3 = arith.constant 0 : index
    %2 = vector.load %arg3[%c1, %c0_2, %c0_3] : memref<2x8x32xf32, #tpu.memory_space<vmem>>, vector<1x8x32xf32>
    %3 = vector.shape_cast %2 : vector<1x8x32xf32> to vector<8x32xf32>
    %c0_4 = arith.constant 0 : index
    %c0_5 = arith.constant 0 : index
    %c0_6 = arith.constant 0 : index
    %4 = vector.load %arg4[%c0_4, %c0_5, %c0_6] : memref<8x16x32xf32, #tpu.memory_space<vmem>>, vector<8x16x32xf32>
    %c0_7 = arith.constant 0 : index
    %c0_8 = arith.constant 0 : index
    %5 = vector.load %arg5[%c0_7, %c0_8] : memref<8x16xf32, #tpu.memory_space<vmem>>, vector<8x16xf32>
    %c0_9 = arith.constant 0 : index
    %c0_10 = arith.constant 0 : index
    %6 = vector.load %arg2[%c0_9, %c0_10] : memref<8x16xbf16, #tpu.memory_space<vmem>>, vector<8x16xbf16>
    %7 = arith.truncf %3 : vector<8x32xf32> to vector<8x32xbf16>
    %c0_11 = arith.constant 0 : index
    %c0_12 = arith.constant 0 : index
    %8 = vector.load %arg6[%c0_11, %c0_12] : memref<32x161xbf16, #tpu.memory_space<vmem>>, vector<32x161xbf16>
    %cst = arith.constant dense<0.000000e+00> : vector<8x161xf32>
    %9 = tpu.matmul %7, %8, %cst {dimension_numbers = #tpu.dot_dimension_numbers<[1], [0], [0], [1], [0, 0, 1, 1], [], []>} : vector<8x32xbf16>, vector<32x161xbf16>, vector<8x161xf32> -> vector<8x161xf32>
    %10 = vector.extract_strided_slice %9 {offsets = [0, 0], sizes = [8, 32], strides = [1, 1]} : vector<8x161xf32> to vector<8x32xf32>
    %11 = vector.extract_strided_slice %9 {offsets = [0, 32], sizes = [8, 32], strides = [1, 1]} : vector<8x161xf32> to vector<8x32xf32>
    %12 = vector.extract_strided_slice %9 {offsets = [0, 64], sizes = [8, 96], strides = [1, 1]} : vector<8x161xf32> to vector<8x96xf32>
    %c0_13 = arith.constant 0 : index
    %c0_14 = arith.constant 0 : index
    %13 = vector.load %arg20[%c0_13, %c0_14] : memref<1x96xf32, #tpu.memory_space<vmem>>, vector<1x96xf32>
    %14 = vector.shape_cast %13 : vector<1x96xf32> to vector<96xf32>
    %15 = vector.shape_cast %14 : vector<96xf32> to vector<1x96xf32>
    %16 = vector.broadcast %15 : vector<1x96xf32> to vector<8x96xf32>
    %17 = arith.addf %12, %16 : vector<8x96xf32>
    %18 = vector.extract_strided_slice %9 {offsets = [0, 160], sizes = [8, 1], strides = [1, 1]} : vector<8x161xf32> to vector<8x1xf32>
    %19 = vector.shape_cast %4 : vector<8x16x32xf32> to vector<128x32xf32>
    %20 = arith.truncf %19 : vector<128x32xf32> to vector<128x32xbf16>
    %c0_15 = arith.constant 0 : index
    %c0_16 = arith.constant 0 : index
    %21 = vector.load %arg7[%c0_15, %c0_16] : memref<32x64xbf16, #tpu.memory_space<vmem>>, vector<32x64xbf16>
    %cst_17 = arith.constant dense<0.000000e+00> : vector<128x64xf32>
    %22 = tpu.matmul %20, %21, %cst_17 {dimension_numbers = #tpu.dot_dimension_numbers<[1], [0], [0], [1], [0, 0, 1, 1], [], []>} : vector<128x32xbf16>, vector<32x64xbf16>, vector<128x64xf32> -> vector<128x64xf32>
    %23 = vector.shape_cast %22 : vector<128x64xf32> to vector<8x16x64xf32>
    %24 = vector.extract_strided_slice %23 {offsets = [0, 0, 0], sizes = [8, 16, 32], strides = [1, 1, 1]} : vector<8x16x64xf32> to vector<8x16x32xf32>
    %c0_18 = arith.constant 0 : index
    %c0_19 = arith.constant 0 : index
    %25 = vector.load %arg15[%c0_18, %c0_19] : memref<1x32xf32, #tpu.memory_space<vmem>>, vector<1x32xf32>
    %c0_20 = arith.constant 0 : index
    %c0_21 = arith.constant 0 : index
    %26 = vector.load %arg13[%c0_20, %c0_21] : memref<1x32xf32, #tpu.memory_space<vmem>>, vector<1x32xf32>
    %27 = vector.shape_cast %10 : vector<8x32xf32> to vector<8x1x32xf32>
    %28 = vector.broadcast %27 : vector<8x1x32xf32> to vector<8x16x32xf32>
    %29 = arith.addf %24, %28 : vector<8x16x32xf32>
    %30 = vector.shape_cast %25 : vector<1x32xf32> to vector<32xf32>
    %31 = vector.shape_cast %30 : vector<32xf32> to vector<1x1x32xf32>
    %32 = vector.broadcast %31 : vector<1x1x32xf32> to vector<8x16x32xf32>
    %33 = arith.addf %29, %32 : vector<8x16x32xf32>
    %34 = math.tanh %33 : vector<8x16x32xf32>
    %35 = vector.shape_cast %26 : vector<1x32xf32> to vector<32xf32>
    %36 = vector.shape_cast %35 : vector<32xf32> to vector<1x1x32xf32>
    %37 = vector.broadcast %36 : vector<1x1x32xf32> to vector<8x16x32xf32>
    %38 = arith.mulf %34, %37 : vector<8x16x32xf32>
    %cst_22 = arith.constant dense<0.000000e+00> : vector<8x16xf32>
    %39 = vector.multi_reduction <add>, %38, %cst_22 [2] : vector<8x16x32xf32> to vector<8x16xf32>
    %cst_23 = arith.constant 0.000000e+00 : f32
    %40 = vector.broadcast %cst_23 : f32 to vector<8x16xf32>
    %41 = arith.cmpf one, %5, %40 : vector<8x16xf32>
    %cst_24 = arith.constant -1.000000e+10 : f32
    %42 = vector.broadcast %cst_24 : f32 to vector<8x16xf32>
    %43 = arith.select %41, %39, %42 : vector<8x16xi1>, vector<8x16xf32>
    %cst_25 = arith.constant dense<0xFF800000> : vector<8xf32>
    %44 = vector.multi_reduction <maximumf>, %43, %cst_25 [1] : vector<8x16xf32> to vector<8xf32>
    %45 = vector.shape_cast %44 : vector<8xf32> to vector<8x1xf32>
    %46 = vector.broadcast %45 : vector<8x1xf32> to vector<8x16xf32>
    %47 = arith.subf %43, %46 : vector<8x16xf32>
    %48 = math.exp %47 : vector<8x16xf32>
    %cst_26 = arith.constant dense<0.000000e+00> : vector<8xf32>
    %49 = vector.multi_reduction <add>, %48, %cst_26 [1] : vector<8x16xf32> to vector<8xf32>
    %50 = vector.shape_cast %49 : vector<8xf32> to vector<8x1xf32>
    %51 = vector.broadcast %50 : vector<8x1xf32> to vector<8x16xf32>
    %52 = arith.divf %48, %51 : vector<8x16xf32>
    %53 = vector.extract_strided_slice %23 {offsets = [0, 0, 32], sizes = [8, 16, 32], strides = [1, 1, 1]} : vector<8x16x64xf32> to vector<8x16x32xf32>
    %c0_27 = arith.constant 0 : index
    %c0_28 = arith.constant 0 : index
    %54 = vector.load %arg16[%c0_27, %c0_28] : memref<1x32xf32, #tpu.memory_space<vmem>>, vector<1x32xf32>
    %c0_29 = arith.constant 0 : index
    %c0_30 = arith.constant 0 : index
    %55 = vector.load %arg14[%c0_29, %c0_30] : memref<1x32xf32, #tpu.memory_space<vmem>>, vector<1x32xf32>
    %56 = vector.shape_cast %11 : vector<8x32xf32> to vector<8x1x32xf32>
    %57 = vector.broadcast %56 : vector<8x1x32xf32> to vector<8x16x32xf32>
    %58 = arith.addf %53, %57 : vector<8x16x32xf32>
    %59 = vector.shape_cast %54 : vector<1x32xf32> to vector<32xf32>
    %60 = vector.shape_cast %59 : vector<32xf32> to vector<1x1x32xf32>
    %61 = vector.broadcast %60 : vector<1x1x32xf32> to vector<8x16x32xf32>
    %62 = arith.addf %58, %61 : vector<8x16x32xf32>
    %63 = math.tanh %62 : vector<8x16x32xf32>
    %64 = vector.shape_cast %55 : vector<1x32xf32> to vector<32xf32>
    %65 = vector.shape_cast %64 : vector<32xf32> to vector<1x1x32xf32>
    %66 = vector.broadcast %65 : vector<1x1x32xf32> to vector<8x16x32xf32>
    %67 = arith.mulf %63, %66 : vector<8x16x32xf32>
    %cst_31 = arith.constant dense<0.000000e+00> : vector<8x16xf32>
    %68 = vector.multi_reduction <add>, %67, %cst_31 [2] : vector<8x16x32xf32> to vector<8x16xf32>
    %cst_32 = arith.constant 0.000000e+00 : f32
    %69 = vector.broadcast %cst_32 : f32 to vector<8x16xf32>
    %70 = arith.cmpf one, %5, %69 : vector<8x16xf32>
    %cst_33 = arith.constant -1.000000e+10 : f32
    %71 = vector.broadcast %cst_33 : f32 to vector<8x16xf32>
    %72 = arith.select %70, %68, %71 : vector<8x16xi1>, vector<8x16xf32>
    %cst_34 = arith.constant dense<0xFF800000> : vector<8xf32>
    %73 = vector.multi_reduction <maximumf>, %72, %cst_34 [1] : vector<8x16xf32> to vector<8xf32>
    %74 = vector.shape_cast %73 : vector<8xf32> to vector<8x1xf32>
    %75 = vector.broadcast %74 : vector<8x1xf32> to vector<8x16xf32>
    %76 = arith.subf %72, %75 : vector<8x16xf32>
    %77 = math.exp %76 : vector<8x16xf32>
    %cst_35 = arith.constant dense<0.000000e+00> : vector<8xf32>
    %78 = vector.multi_reduction <add>, %77, %cst_35 [1] : vector<8x16xf32> to vector<8xf32>
    %79 = vector.shape_cast %78 : vector<8xf32> to vector<8x1xf32>
    %80 = vector.broadcast %79 : vector<8x1xf32> to vector<8x16xf32>
    %81 = arith.divf %77, %80 : vector<8x16xf32>
    %82 = vector.shape_cast %52 : vector<8x16xf32> to vector<8x16x1xf32>
    %83 = vector.broadcast %82 : vector<8x16x1xf32> to vector<8x16x32xf32>
    %84 = arith.mulf %83, %4 : vector<8x16x32xf32>
    %cst_36 = arith.constant dense<0.000000e+00> : vector<8x32xf32>
    %85 = vector.multi_reduction <add>, %84, %cst_36 [1] : vector<8x16x32xf32> to vector<8x32xf32>
    %86 = arith.truncf %85 : vector<8x32xf32> to vector<8x32xbf16>
    %c0_37 = arith.constant 0 : index
    %c0_38 = arith.constant 0 : index
    %87 = vector.load %arg8[%c0_37, %c0_38] : memref<32x161xbf16, #tpu.memory_space<vmem>>, vector<32x161xbf16>
    %cst_39 = arith.constant dense<0.000000e+00> : vector<8x161xf32>
    %88 = tpu.matmul %86, %87, %cst_39 {dimension_numbers = #tpu.dot_dimension_numbers<[1], [0], [0], [1], [0, 0, 1, 1], [], []>} : vector<8x32xbf16>, vector<32x161xbf16>, vector<8x161xf32> -> vector<8x161xf32>
    %89 = vector.extract_strided_slice %88 {offsets = [0, 0], sizes = [8, 96], strides = [1, 1]} : vector<8x161xf32> to vector<8x96xf32>
    %90 = vector.extract_strided_slice %88 {offsets = [0, 96], sizes = [8, 1], strides = [1, 1]} : vector<8x161xf32> to vector<8x1xf32>
    %91 = vector.extract_strided_slice %88 {offsets = [0, 97], sizes = [8, 64], strides = [1, 1]} : vector<8x161xf32> to vector<8x64xf32>
    %c0_40 = arith.constant 0 : index
    %c0_41 = arith.constant 0 : index
    %92 = vector.load %arg9[%c0_40, %c0_41] : memref<16x160xbf16, #tpu.memory_space<vmem>>, vector<16x160xbf16>
    %cst_42 = arith.constant dense<0.000000e+00> : vector<8x160xf32>
    %93 = tpu.matmul %6, %92, %cst_42 {dimension_numbers = #tpu.dot_dimension_numbers<[1], [0], [0], [1], [0, 0, 1, 1], [], []>} : vector<8x16xbf16>, vector<16x160xbf16>, vector<8x160xf32> -> vector<8x160xf32>
    %94 = vector.extract_strided_slice %93 {offsets = [0, 0], sizes = [8, 96], strides = [1, 1]} : vector<8x160xf32> to vector<8x96xf32>
    %95 = vector.extract_strided_slice %93 {offsets = [0, 96], sizes = [8, 64], strides = [1, 1]} : vector<8x160xf32> to vector<8x64xf32>
    %96 = arith.addf %90, %18 : vector<8x1xf32>
    %c0_43 = arith.constant 0 : index
    %c0_44 = arith.constant 0 : index
    %97 = memref.load %arg22[%c0_43, %c0_44] : memref<1x1xf32, #tpu.memory_space<smem>>
    %98 = vector.broadcast %97 : f32 to vector<8x1xf32>
    %99 = arith.addf %96, %98 : vector<8x1xf32>
    %100 = arith.negf %99 : vector<8x1xf32>
    %101 = math.exp %100 : vector<8x1xf32>
    %cst_45 = arith.constant 1.000000e+00 : f32
    %102 = vector.broadcast %cst_45 : f32 to vector<8x1xf32>
    %103 = arith.addf %102, %101 : vector<8x1xf32>
    %104 = arith.divf %102, %103 : vector<8x1xf32>
    %105 = arith.addf %89, %94 : vector<8x96xf32>
    %c0_46 = arith.constant 0 : index
    %c0_47 = arith.constant 0 : index
    %106 = vector.load %arg17[%c0_46, %c0_47] : memref<1x96xf32, #tpu.memory_space<vmem>>, vector<1x96xf32>
    %107 = vector.shape_cast %106 : vector<1x96xf32> to vector<96xf32>
    %108 = vector.shape_cast %107 : vector<96xf32> to vector<1x96xf32>
    %109 = vector.broadcast %108 : vector<1x96xf32> to vector<8x96xf32>
    %110 = arith.addf %105, %109 : vector<8x96xf32>
    %111 = arith.truncf %1 : vector<8x32xf32> to vector<8x32xbf16>
    %c0_48 = arith.constant 0 : index
    %c0_49 = arith.constant 0 : index
    %112 = vector.load %arg11[%c0_48, %c0_49] : memref<32x96xbf16, #tpu.memory_space<vmem>>, vector<32x96xbf16>
    %cst_50 = arith.constant dense<0.000000e+00> : vector<8x96xf32>
    %113 = tpu.matmul %111, %112, %cst_50 {dimension_numbers = #tpu.dot_dimension_numbers<[1], [0], [0], [1], [0, 0, 1, 1], [], []>} : vector<8x32xbf16>, vector<32x96xbf16>, vector<8x96xf32> -> vector<8x96xf32>
    %c0_51 = arith.constant 0 : index
    %c0_52 = arith.constant 0 : index
    %114 = vector.load %arg18[%c0_51, %c0_52] : memref<1x96xf32, #tpu.memory_space<vmem>>, vector<1x96xf32>
    %115 = vector.shape_cast %114 : vector<1x96xf32> to vector<96xf32>
    %116 = vector.shape_cast %115 : vector<96xf32> to vector<1x96xf32>
    %117 = vector.broadcast %116 : vector<1x96xf32> to vector<8x96xf32>
    %118 = arith.addf %113, %117 : vector<8x96xf32>
    %119 = vector.extract_strided_slice %110 {offsets = [0, 0], sizes = [8, 32], strides = [1, 1]} : vector<8x96xf32> to vector<8x32xf32>
    %120 = vector.extract_strided_slice %118 {offsets = [0, 0], sizes = [8, 32], strides = [1, 1]} : vector<8x96xf32> to vector<8x32xf32>
    %121 = arith.addf %119, %120 : vector<8x32xf32>
    %122 = arith.negf %121 : vector<8x32xf32>
    %123 = math.exp %122 : vector<8x32xf32>
    %cst_53 = arith.constant 1.000000e+00 : f32
    %124 = vector.broadcast %cst_53 : f32 to vector<8x32xf32>
    %125 = arith.addf %124, %123 : vector<8x32xf32>
    %126 = arith.divf %124, %125 : vector<8x32xf32>
    %127 = vector.extract_strided_slice %110 {offsets = [0, 32], sizes = [8, 32], strides = [1, 1]} : vector<8x96xf32> to vector<8x32xf32>
    %128 = vector.extract_strided_slice %118 {offsets = [0, 32], sizes = [8, 32], strides = [1, 1]} : vector<8x96xf32> to vector<8x32xf32>
    %129 = arith.addf %127, %128 : vector<8x32xf32>
    %130 = arith.negf %129 : vector<8x32xf32>
    %131 = math.exp %130 : vector<8x32xf32>
    %cst_54 = arith.constant 1.000000e+00 : f32
    %132 = vector.broadcast %cst_54 : f32 to vector<8x32xf32>
    %133 = arith.addf %132, %131 : vector<8x32xf32>
    %134 = arith.divf %132, %133 : vector<8x32xf32>
    %135 = vector.extract_strided_slice %110 {offsets = [0, 64], sizes = [8, 32], strides = [1, 1]} : vector<8x96xf32> to vector<8x32xf32>
    %136 = vector.extract_strided_slice %118 {offsets = [0, 64], sizes = [8, 32], strides = [1, 1]} : vector<8x96xf32> to vector<8x32xf32>
    %137 = arith.mulf %126, %136 : vector<8x32xf32>
    %138 = arith.addf %135, %137 : vector<8x32xf32>
    %139 = math.tanh %138 : vector<8x32xf32>
    %cst_55 = arith.constant 1.000000e+00 : f32
    %140 = vector.broadcast %cst_55 : f32 to vector<8x32xf32>
    %141 = arith.subf %140, %134 : vector<8x32xf32>
    %142 = arith.mulf %141, %139 : vector<8x32xf32>
    %143 = arith.mulf %134, %1 : vector<8x32xf32>
    %144 = arith.addf %142, %143 : vector<8x32xf32>
    %145 = arith.truncf %144 : vector<8x32xf32> to vector<8x32xbf16>
    %c0_56 = arith.constant 0 : index
    %c0_57 = arith.constant 0 : index
    %146 = vector.load %arg10[%c0_56, %c0_57] : memref<32x96xbf16, #tpu.memory_space<vmem>>, vector<32x96xbf16>
    %cst_58 = arith.constant dense<0.000000e+00> : vector<8x96xf32>
    %147 = tpu.matmul %145, %146, %cst_58 {dimension_numbers = #tpu.dot_dimension_numbers<[1], [0], [0], [1], [0, 0, 1, 1], [], []>} : vector<8x32xbf16>, vector<32x96xbf16>, vector<8x96xf32> -> vector<8x96xf32>
    %c0_59 = arith.constant 0 : index
    %c0_60 = arith.constant 0 : index
    %148 = vector.load %arg19[%c0_59, %c0_60] : memref<1x96xf32, #tpu.memory_space<vmem>>, vector<1x96xf32>
    %149 = vector.shape_cast %148 : vector<1x96xf32> to vector<96xf32>
    %150 = vector.shape_cast %149 : vector<96xf32> to vector<1x96xf32>
    %151 = vector.broadcast %150 : vector<1x96xf32> to vector<8x96xf32>
    %152 = arith.addf %147, %151 : vector<8x96xf32>
    %153 = vector.extract_strided_slice %152 {offsets = [0, 0], sizes = [8, 32], strides = [1, 1]} : vector<8x96xf32> to vector<8x32xf32>
    %154 = vector.extract_strided_slice %17 {offsets = [0, 0], sizes = [8, 32], strides = [1, 1]} : vector<8x96xf32> to vector<8x32xf32>
    %155 = arith.addf %153, %154 : vector<8x32xf32>
    %156 = arith.negf %155 : vector<8x32xf32>
    %157 = math.exp %156 : vector<8x32xf32>
    %cst_61 = arith.constant 1.000000e+00 : f32
    %158 = vector.broadcast %cst_61 : f32 to vector<8x32xf32>
    %159 = arith.addf %158, %157 : vector<8x32xf32>
    %160 = arith.divf %158, %159 : vector<8x32xf32>
    %161 = vector.extract_strided_slice %152 {offsets = [0, 32], sizes = [8, 32], strides = [1, 1]} : vector<8x96xf32> to vector<8x32xf32>
    %162 = vector.extract_strided_slice %17 {offsets = [0, 32], sizes = [8, 32], strides = [1, 1]} : vector<8x96xf32> to vector<8x32xf32>
    %163 = arith.addf %161, %162 : vector<8x32xf32>
    %164 = arith.negf %163 : vector<8x32xf32>
    %165 = math.exp %164 : vector<8x32xf32>
    %cst_62 = arith.constant 1.000000e+00 : f32
    %166 = vector.broadcast %cst_62 : f32 to vector<8x32xf32>
    %167 = arith.addf %166, %165 : vector<8x32xf32>
    %168 = arith.divf %166, %167 : vector<8x32xf32>
    %169 = vector.extract_strided_slice %152 {offsets = [0, 64], sizes = [8, 32], strides = [1, 1]} : vector<8x96xf32> to vector<8x32xf32>
    %170 = vector.extract_strided_slice %17 {offsets = [0, 64], sizes = [8, 32], strides = [1, 1]} : vector<8x96xf32> to vector<8x32xf32>
    %171 = arith.mulf %160, %170 : vector<8x32xf32>
    %172 = arith.addf %169, %171 : vector<8x32xf32>
    %173 = math.tanh %172 : vector<8x32xf32>
    %cst_63 = arith.constant 1.000000e+00 : f32
    %174 = vector.broadcast %cst_63 : f32 to vector<8x32xf32>
    %175 = arith.subf %174, %168 : vector<8x32xf32>
    %176 = arith.mulf %175, %173 : vector<8x32xf32>
    %177 = arith.mulf %168, %3 : vector<8x32xf32>
    %178 = arith.addf %176, %177 : vector<8x32xf32>
    %179 = arith.truncf %178 : vector<8x32xf32> to vector<8x32xbf16>
    %c0_64 = arith.constant 0 : index
    %c0_65 = arith.constant 0 : index
    %180 = vector.load %arg12[%c0_64, %c0_65] : memref<32x64xbf16, #tpu.memory_space<vmem>>, vector<32x64xbf16>
    %cst_66 = arith.constant dense<0.000000e+00> : vector<8x64xf32>
    %181 = tpu.matmul %179, %180, %cst_66 {dimension_numbers = #tpu.dot_dimension_numbers<[1], [0], [0], [1], [0, 0, 1, 1], [], []>} : vector<8x32xbf16>, vector<32x64xbf16>, vector<8x64xf32> -> vector<8x64xf32>
    %182 = arith.addf %181, %91 : vector<8x64xf32>
    %183 = arith.addf %182, %95 : vector<8x64xf32>
    %c0_67 = arith.constant 0 : index
    %c0_68 = arith.constant 0 : index
    %184 = vector.load %arg21[%c0_67, %c0_68] : memref<1x64xf32, #tpu.memory_space<vmem>>, vector<1x64xf32>
    %185 = vector.shape_cast %184 : vector<1x64xf32> to vector<64xf32>
    %186 = vector.shape_cast %185 : vector<64xf32> to vector<1x64xf32>
    %187 = vector.broadcast %186 : vector<1x64xf32> to vector<8x64xf32>
    %188 = arith.addf %183, %187 : vector<8x64xf32>
    %c0_69 = arith.constant 0 : index
    %c0_70 = arith.constant 0 : index
    %189 = vector.load %arg1[%c0_69, %c0_70] : memref<8x16xi32, #tpu.memory_space<vmem>>, vector<8x16xi32>
    %190 = tpu.iota {dimensions = array<i32: 1>} : vector<8x64xi32>
    %cst_71 = arith.constant 0.000000e+00 : f32
    %191 = vector.broadcast %cst_71 : f32 to vector<8x64xf32>
    %192 = vector.extract_strided_slice %189 {offsets = [0, 0], sizes = [8, 1], strides = [1, 1]} : vector<8x16xi32> to vector<8x1xi32>
    %193 = vector.broadcast %192 : vector<8x1xi32> to vector<8x64xi32>
    %194 = arith.cmpi eq, %193, %190 : vector<8x64xi32>
    %195 = arith.extui %194 : vector<8x64xi1> to vector<8x64xi32>
    %196 = arith.sitofp %195 : vector<8x64xi32> to vector<8x64xf32>
    %197 = vector.extract_strided_slice %81 {offsets = [0, 0], sizes = [8, 1], strides = [1, 1]} : vector<8x16xf32> to vector<8x1xf32>
    %198 = vector.broadcast %197 : vector<8x1xf32> to vector<8x64xf32>
    %199 = arith.mulf %198, %196 : vector<8x64xf32>
    %200 = arith.addf %191, %199 : vector<8x64xf32>
    %201 = vector.extract_strided_slice %189 {offsets = [0, 1], sizes = [8, 1], strides = [1, 1]} : vector<8x16xi32> to vector<8x1xi32>
    %202 = vector.broadcast %201 : vector<8x1xi32> to vector<8x64xi32>
    %203 = arith.cmpi eq, %202, %190 : vector<8x64xi32>
    %204 = arith.extui %203 : vector<8x64xi1> to vector<8x64xi32>
    %205 = arith.sitofp %204 : vector<8x64xi32> to vector<8x64xf32>
    %206 = vector.extract_strided_slice %81 {offsets = [0, 1], sizes = [8, 1], strides = [1, 1]} : vector<8x16xf32> to vector<8x1xf32>
    %207 = vector.broadcast %206 : vector<8x1xf32> to vector<8x64xf32>
    %208 = arith.mulf %207, %205 : vector<8x64xf32>
    %209 = arith.addf %200, %208 : vector<8x64xf32>
    %210 = vector.extract_strided_slice %189 {offsets = [0, 2], sizes = [8, 1], strides = [1, 1]} : vector<8x16xi32> to vector<8x1xi32>
    %211 = vector.broadcast %210 : vector<8x1xi32> to vector<8x64xi32>
    %212 = arith.cmpi eq, %211, %190 : vector<8x64xi32>
    %213 = arith.extui %212 : vector<8x64xi1> to vector<8x64xi32>
    %214 = arith.sitofp %213 : vector<8x64xi32> to vector<8x64xf32>
    %215 = vector.extract_strided_slice %81 {offsets = [0, 2], sizes = [8, 1], strides = [1, 1]} : vector<8x16xf32> to vector<8x1xf32>
    %216 = vector.broadcast %215 : vector<8x1xf32> to vector<8x64xf32>
    %217 = arith.mulf %216, %214 : vector<8x64xf32>
    %218 = arith.addf %209, %217 : vector<8x64xf32>
    %219 = vector.extract_strided_slice %189 {offsets = [0, 3], sizes = [8, 1], strides = [1, 1]} : vector<8x16xi32> to vector<8x1xi32>
    %220 = vector.broadcast %219 : vector<8x1xi32> to vector<8x64xi32>
    %221 = arith.cmpi eq, %220, %190 : vector<8x64xi32>
    %222 = arith.extui %221 : vector<8x64xi1> to vector<8x64xi32>
    %223 = arith.sitofp %222 : vector<8x64xi32> to vector<8x64xf32>
    %224 = vector.extract_strided_slice %81 {offsets = [0, 3], sizes = [8, 1], strides = [1, 1]} : vector<8x16xf32> to vector<8x1xf32>
    %225 = vector.broadcast %224 : vector<8x1xf32> to vector<8x64xf32>
    %226 = arith.mulf %225, %223 : vector<8x64xf32>
    %227 = arith.addf %218, %226 : vector<8x64xf32>
    %228 = vector.extract_strided_slice %189 {offsets = [0, 4], sizes = [8, 1], strides = [1, 1]} : vector<8x16xi32> to vector<8x1xi32>
    %229 = vector.broadcast %228 : vector<8x1xi32> to vector<8x64xi32>
    %230 = arith.cmpi eq, %229, %190 : vector<8x64xi32>
    %231 = arith.extui %230 : vector<8x64xi1> to vector<8x64xi32>
    %232 = arith.sitofp %231 : vector<8x64xi32> to vector<8x64xf32>
    %233 = vector.extract_strided_slice %81 {offsets = [0, 4], sizes = [8, 1], strides = [1, 1]} : vector<8x16xf32> to vector<8x1xf32>
    %234 = vector.broadcast %233 : vector<8x1xf32> to vector<8x64xf32>
    %235 = arith.mulf %234, %232 : vector<8x64xf32>
    %236 = arith.addf %227, %235 : vector<8x64xf32>
    %237 = vector.extract_strided_slice %189 {offsets = [0, 5], sizes = [8, 1], strides = [1, 1]} : vector<8x16xi32> to vector<8x1xi32>
    %238 = vector.broadcast %237 : vector<8x1xi32> to vector<8x64xi32>
    %239 = arith.cmpi eq, %238, %190 : vector<8x64xi32>
    %240 = arith.extui %239 : vector<8x64xi1> to vector<8x64xi32>
    %241 = arith.sitofp %240 : vector<8x64xi32> to vector<8x64xf32>
    %242 = vector.extract_strided_slice %81 {offsets = [0, 5], sizes = [8, 1], strides = [1, 1]} : vector<8x16xf32> to vector<8x1xf32>
    %243 = vector.broadcast %242 : vector<8x1xf32> to vector<8x64xf32>
    %244 = arith.mulf %243, %241 : vector<8x64xf32>
    %245 = arith.addf %236, %244 : vector<8x64xf32>
    %246 = vector.extract_strided_slice %189 {offsets = [0, 6], sizes = [8, 1], strides = [1, 1]} : vector<8x16xi32> to vector<8x1xi32>
    %247 = vector.broadcast %246 : vector<8x1xi32> to vector<8x64xi32>
    %248 = arith.cmpi eq, %247, %190 : vector<8x64xi32>
    %249 = arith.extui %248 : vector<8x64xi1> to vector<8x64xi32>
    %250 = arith.sitofp %249 : vector<8x64xi32> to vector<8x64xf32>
    %251 = vector.extract_strided_slice %81 {offsets = [0, 6], sizes = [8, 1], strides = [1, 1]} : vector<8x16xf32> to vector<8x1xf32>
    %252 = vector.broadcast %251 : vector<8x1xf32> to vector<8x64xf32>
    %253 = arith.mulf %252, %250 : vector<8x64xf32>
    %254 = arith.addf %245, %253 : vector<8x64xf32>
    %255 = vector.extract_strided_slice %189 {offsets = [0, 7], sizes = [8, 1], strides = [1, 1]} : vector<8x16xi32> to vector<8x1xi32>
    %256 = vector.broadcast %255 : vector<8x1xi32> to vector<8x64xi32>
    %257 = arith.cmpi eq, %256, %190 : vector<8x64xi32>
    %258 = arith.extui %257 : vector<8x64xi1> to vector<8x64xi32>
    %259 = arith.sitofp %258 : vector<8x64xi32> to vector<8x64xf32>
    %260 = vector.extract_strided_slice %81 {offsets = [0, 7], sizes = [8, 1], strides = [1, 1]} : vector<8x16xf32> to vector<8x1xf32>
    %261 = vector.broadcast %260 : vector<8x1xf32> to vector<8x64xf32>
    %262 = arith.mulf %261, %259 : vector<8x64xf32>
    %263 = arith.addf %254, %262 : vector<8x64xf32>
    %264 = vector.extract_strided_slice %189 {offsets = [0, 8], sizes = [8, 1], strides = [1, 1]} : vector<8x16xi32> to vector<8x1xi32>
    %265 = vector.broadcast %264 : vector<8x1xi32> to vector<8x64xi32>
    %266 = arith.cmpi eq, %265, %190 : vector<8x64xi32>
    %267 = arith.extui %266 : vector<8x64xi1> to vector<8x64xi32>
    %268 = arith.sitofp %267 : vector<8x64xi32> to vector<8x64xf32>
    %269 = vector.extract_strided_slice %81 {offsets = [0, 8], sizes = [8, 1], strides = [1, 1]} : vector<8x16xf32> to vector<8x1xf32>
    %270 = vector.broadcast %269 : vector<8x1xf32> to vector<8x64xf32>
    %271 = arith.mulf %270, %268 : vector<8x64xf32>
    %272 = arith.addf %263, %271 : vector<8x64xf32>
    %273 = vector.extract_strided_slice %189 {offsets = [0, 9], sizes = [8, 1], strides = [1, 1]} : vector<8x16xi32> to vector<8x1xi32>
    %274 = vector.broadcast %273 : vector<8x1xi32> to vector<8x64xi32>
    %275 = arith.cmpi eq, %274, %190 : vector<8x64xi32>
    %276 = arith.extui %275 : vector<8x64xi1> to vector<8x64xi32>
    %277 = arith.sitofp %276 : vector<8x64xi32> to vector<8x64xf32>
    %278 = vector.extract_strided_slice %81 {offsets = [0, 9], sizes = [8, 1], strides = [1, 1]} : vector<8x16xf32> to vector<8x1xf32>
    %279 = vector.broadcast %278 : vector<8x1xf32> to vector<8x64xf32>
    %280 = arith.mulf %279, %277 : vector<8x64xf32>
    %281 = arith.addf %272, %280 : vector<8x64xf32>
    %282 = vector.extract_strided_slice %189 {offsets = [0, 10], sizes = [8, 1], strides = [1, 1]} : vector<8x16xi32> to vector<8x1xi32>
    %283 = vector.broadcast %282 : vector<8x1xi32> to vector<8x64xi32>
    %284 = arith.cmpi eq, %283, %190 : vector<8x64xi32>
    %285 = arith.extui %284 : vector<8x64xi1> to vector<8x64xi32>
    %286 = arith.sitofp %285 : vector<8x64xi32> to vector<8x64xf32>
    %287 = vector.extract_strided_slice %81 {offsets = [0, 10], sizes = [8, 1], strides = [1, 1]} : vector<8x16xf32> to vector<8x1xf32>
    %288 = vector.broadcast %287 : vector<8x1xf32> to vector<8x64xf32>
    %289 = arith.mulf %288, %286 : vector<8x64xf32>
    %290 = arith.addf %281, %289 : vector<8x64xf32>
    %291 = vector.extract_strided_slice %189 {offsets = [0, 11], sizes = [8, 1], strides = [1, 1]} : vector<8x16xi32> to vector<8x1xi32>
    %292 = vector.broadcast %291 : vector<8x1xi32> to vector<8x64xi32>
    %293 = arith.cmpi eq, %292, %190 : vector<8x64xi32>
    %294 = arith.extui %293 : vector<8x64xi1> to vector<8x64xi32>
    %295 = arith.sitofp %294 : vector<8x64xi32> to vector<8x64xf32>
    %296 = vector.extract_strided_slice %81 {offsets = [0, 11], sizes = [8, 1], strides = [1, 1]} : vector<8x16xf32> to vector<8x1xf32>
    %297 = vector.broadcast %296 : vector<8x1xf32> to vector<8x64xf32>
    %298 = arith.mulf %297, %295 : vector<8x64xf32>
    %299 = arith.addf %290, %298 : vector<8x64xf32>
    %300 = vector.extract_strided_slice %189 {offsets = [0, 12], sizes = [8, 1], strides = [1, 1]} : vector<8x16xi32> to vector<8x1xi32>
    %301 = vector.broadcast %300 : vector<8x1xi32> to vector<8x64xi32>
    %302 = arith.cmpi eq, %301, %190 : vector<8x64xi32>
    %303 = arith.extui %302 : vector<8x64xi1> to vector<8x64xi32>
    %304 = arith.sitofp %303 : vector<8x64xi32> to vector<8x64xf32>
    %305 = vector.extract_strided_slice %81 {offsets = [0, 12], sizes = [8, 1], strides = [1, 1]} : vector<8x16xf32> to vector<8x1xf32>
    %306 = vector.broadcast %305 : vector<8x1xf32> to vector<8x64xf32>
    %307 = arith.mulf %306, %304 : vector<8x64xf32>
    %308 = arith.addf %299, %307 : vector<8x64xf32>
    %309 = vector.extract_strided_slice %189 {offsets = [0, 13], sizes = [8, 1], strides = [1, 1]} : vector<8x16xi32> to vector<8x1xi32>
    %310 = vector.broadcast %309 : vector<8x1xi32> to vector<8x64xi32>
    %311 = arith.cmpi eq, %310, %190 : vector<8x64xi32>
    %312 = arith.extui %311 : vector<8x64xi1> to vector<8x64xi32>
    %313 = arith.sitofp %312 : vector<8x64xi32> to vector<8x64xf32>
    %314 = vector.extract_strided_slice %81 {offsets = [0, 13], sizes = [8, 1], strides = [1, 1]} : vector<8x16xf32> to vector<8x1xf32>
    %315 = vector.broadcast %314 : vector<8x1xf32> to vector<8x64xf32>
    %316 = arith.mulf %315, %313 : vector<8x64xf32>
    %317 = arith.addf %308, %316 : vector<8x64xf32>
    %318 = vector.extract_strided_slice %189 {offsets = [0, 14], sizes = [8, 1], strides = [1, 1]} : vector<8x16xi32> to vector<8x1xi32>
    %319 = vector.broadcast %318 : vector<8x1xi32> to vector<8x64xi32>
    %320 = arith.cmpi eq, %319, %190 : vector<8x64xi32>
    %321 = arith.extui %320 : vector<8x64xi1> to vector<8x64xi32>
    %322 = arith.sitofp %321 : vector<8x64xi32> to vector<8x64xf32>
    %323 = vector.extract_strided_slice %81 {offsets = [0, 14], sizes = [8, 1], strides = [1, 1]} : vector<8x16xf32> to vector<8x1xf32>
    %324 = vector.broadcast %323 : vector<8x1xf32> to vector<8x64xf32>
    %325 = arith.mulf %324, %322 : vector<8x64xf32>
    %326 = arith.addf %317, %325 : vector<8x64xf32>
    %327 = vector.extract_strided_slice %189 {offsets = [0, 15], sizes = [8, 1], strides = [1, 1]} : vector<8x16xi32> to vector<8x1xi32>
    %328 = vector.broadcast %327 : vector<8x1xi32> to vector<8x64xi32>
    %329 = arith.cmpi eq, %328, %190 : vector<8x64xi32>
    %330 = arith.extui %329 : vector<8x64xi1> to vector<8x64xi32>
    %331 = arith.sitofp %330 : vector<8x64xi32> to vector<8x64xf32>
    %332 = vector.extract_strided_slice %81 {offsets = [0, 15], sizes = [8, 1], strides = [1, 1]} : vector<8x16xf32> to vector<8x1xf32>
    %333 = vector.broadcast %332 : vector<8x1xf32> to vector<8x64xf32>
    %334 = arith.mulf %333, %331 : vector<8x64xf32>
    %335 = arith.addf %326, %334 : vector<8x64xf32>
    %cst_72 = arith.constant 1.000000e+00 : f32
    %336 = vector.broadcast %cst_72 : f32 to vector<8x1xf32>
    %337 = arith.subf %336, %104 : vector<8x1xf32>
    %338 = vector.broadcast %337 : vector<8x1xf32> to vector<8x64xf32>
    %339 = arith.mulf %188, %338 : vector<8x64xf32>
    %340 = vector.broadcast %104 : vector<8x1xf32> to vector<8x64xf32>
    %341 = arith.mulf %335, %340 : vector<8x64xf32>
    %342 = arith.addf %339, %341 : vector<8x64xf32>
    %c0_73 = arith.constant 0 : index
    %c0_74 = arith.constant 0 : index
    %343 = vector.load %arg23[%c0_73, %c0_74] : memref<8x64xf32, #tpu.memory_space<vmem>>, vector<8x64xf32>
    tpu.vector_store %arg23[%c0_73, %c0_74], %342 {strides = array<i32>} : memref<8x64xf32, #tpu.memory_space<vmem>>, vector<8x64xf32>,
    %c0_75 = arith.constant 0 : index
    %c0_76 = arith.constant 0 : index
    %c0_77 = arith.constant 0 : index
    %344 = vector.load %arg24[%c0_75, %c0_76, %c0_77] : memref<2x8x32xf32, #tpu.memory_space<vmem>>, vector<1x8x32xf32>
    %345 = vector.shape_cast %344 : vector<1x8x32xf32> to vector<8x32xf32>
    %346 = vector.shape_cast %144 : vector<8x32xf32> to vector<1x8x32xf32>
    tpu.vector_store %arg24[%c0_75, %c0_76, %c0_77], %346 {strides = array<i32>} : memref<2x8x32xf32, #tpu.memory_space<vmem>>, vector<1x8x32xf32>,
    %c1_78 = arith.constant 1 : index
    %c0_79 = arith.constant 0 : index
    %c0_80 = arith.constant 0 : index
    %347 = vector.load %arg24[%c1_78, %c0_79, %c0_80] : memref<2x8x32xf32, #tpu.memory_space<vmem>>, vector<1x8x32xf32>
    %348 = vector.shape_cast %347 : vector<1x8x32xf32> to vector<8x32xf32>
    %349 = vector.shape_cast %178 : vector<8x32xf32> to vector<1x8x32xf32>
    tpu.vector_store %arg24[%c1_78, %c0_79, %c0_80], %349 {strides = array<i32>} : memref<2x8x32xf32, #tpu.memory_space<vmem>>, vector<1x8x32xf32>,
    %c0_81 = arith.constant 0 : index
    %c0_82 = arith.constant 0 : index
    %350 = vector.load %arg25[%c0_81, %c0_82] : memref<8x16xf32, #tpu.memory_space<vmem>>, vector<8x16xf32>
    tpu.vector_store %arg25[%c0_81, %c0_82], %52 {strides = array<i32>} : memref<8x16xf32, #tpu.memory_space<vmem>>, vector<8x16xf32>,
    return
  }
  func.func @transform_0(%arg0: i32) -> (i32, i32) {
    %c0_i32 = arith.constant 0 : i32
    %c0_i32_0 = arith.constant 0 : i32
    return %arg0, %c0_i32 : i32, i32
  }
  func.func @transform_1(%arg0: i32) -> (i32, i32) {
    %c0_i32 = arith.constant 0 : i32
    %c0_i32_0 = arith.constant 0 : i32
    return %arg0, %c0_i32 : i32, i32
  }
  func.func @transform_2(%arg0: i32) -> (i32, i32, i32) {
    %c0_i32 = arith.constant 0 : i32
    %c0_i32_0 = arith.constant 0 : i32
    %c0_i32_1 = arith.constant 0 : i32
    return %c0_i32, %arg0, %c0_i32_0 : i32, i32, i32
  }
  func.func @transform_3(%arg0: i32) -> (i32, i32, i32) {
    %c0_i32 = arith.constant 0 : i32
    %c0_i32_0 = arith.constant 0 : i32
    %c0_i32_1 = arith.constant 0 : i32
    return %arg0, %c0_i32, %c0_i32_0 : i32, i32, i32
  }
  func.func @transform_4(%arg0: i32) -> (i32, i32) {
    %c0_i32 = arith.constant 0 : i32
    %c0_i32_0 = arith.constant 0 : i32
    return %arg0, %c0_i32 : i32, i32
  }
  func.func @transform_5(%arg0: i32) -> (i32, i32) {
    %c0_i32 = arith.constant 0 : i32
    %c0_i32_0 = arith.constant 0 : i32
    %c0_i32_1 = arith.constant 0 : i32
    return %c0_i32, %c0_i32_0 : i32, i32
  }
  func.func @transform_6(%arg0: i32) -> (i32, i32) {
    %c0_i32 = arith.constant 0 : i32
    %c0_i32_0 = arith.constant 0 : i32
    %c0_i32_1 = arith.constant 0 : i32
    return %c0_i32, %c0_i32_0 : i32, i32
  }
  func.func @transform_7(%arg0: i32) -> (i32, i32) {
    %c0_i32 = arith.constant 0 : i32
    %c0_i32_0 = arith.constant 0 : i32
    %c0_i32_1 = arith.constant 0 : i32
    return %c0_i32, %c0_i32_0 : i32, i32
  }
  func.func @transform_8(%arg0: i32) -> (i32, i32) {
    %c0_i32 = arith.constant 0 : i32
    %c0_i32_0 = arith.constant 0 : i32
    %c0_i32_1 = arith.constant 0 : i32
    return %c0_i32, %c0_i32_0 : i32, i32
  }
  func.func @transform_9(%arg0: i32) -> (i32, i32) {
    %c0_i32 = arith.constant 0 : i32
    %c0_i32_0 = arith.constant 0 : i32
    %c0_i32_1 = arith.constant 0 : i32
    return %c0_i32, %c0_i32_0 : i32, i32
  }
  func.func @transform_10(%arg0: i32) -> (i32, i32) {
    %c0_i32 = arith.constant 0 : i32
    %c0_i32_0 = arith.constant 0 : i32
    %c0_i32_1 = arith.constant 0 : i32
    return %c0_i32, %c0_i32_0 : i32, i32
  }
  func.func @transform_11(%arg0: i32) -> (i32, i32) {
    %c0_i32 = arith.constant 0 : i32
    %c0_i32_0 = arith.constant 0 : i32
    %c0_i32_1 = arith.constant 0 : i32
    return %c0_i32, %c0_i32_0 : i32, i32
  }
  func.func @transform_12(%arg0: i32) -> (i32, i32) {
    %c0_i32 = arith.constant 0 : i32
    %c0_i32_0 = arith.constant 0 : i32
    %c0_i32_1 = arith.constant 0 : i32
    return %c0_i32, %c0_i32_0 : i32, i32
  }
  func.func @transform_13(%arg0: i32) -> (i32, i32) {
    %c0_i32 = arith.constant 0 : i32
    %c0_i32_0 = arith.constant 0 : i32
    %c0_i32_1 = arith.constant 0 : i32
    return %c0_i32, %c0_i32_0 : i32, i32
  }
  func.func @transform_14(%arg0: i32) -> (i32, i32) {
    %c0_i32 = arith.constant 0 : i32
    %c0_i32_0 = arith.constant 0 : i32
    %c0_i32_1 = arith.constant 0 : i32
    return %c0_i32, %c0_i32_0 : i32, i32
  }
  func.func @transform_15(%arg0: i32) -> (i32, i32) {
    %c0_i32 = arith.constant 0 : i32
    %c0_i32_0 = arith.constant 0 : i32
    %c0_i32_1 = arith.constant 0 : i32
    return %c0_i32, %c0_i32_0 : i32, i32
  }
  func.func @transform_16(%arg0: i32) -> (i32, i32) {
    %c0_i32 = arith.constant 0 : i32
    %c0_i32_0 = arith.constant 0 : i32
    %c0_i32_1 = arith.constant 0 : i32
    return %c0_i32, %c0_i32_0 : i32, i32
  }
  func.func @transform_17(%arg0: i32) -> (i32, i32) {
    %c0_i32 = arith.constant 0 : i32
    %c0_i32_0 = arith.constant 0 : i32
    %c0_i32_1 = arith.constant 0 : i32
    return %c0_i32, %c0_i32_0 : i32, i32
  }
  func.func @transform_18(%arg0: i32) -> (i32, i32) {
    %c0_i32 = arith.constant 0 : i32
    %c0_i32_0 = arith.constant 0 : i32
    %c0_i32_1 = arith.constant 0 : i32
    return %c0_i32, %c0_i32_0 : i32, i32
  }
  func.func @transform_19(%arg0: i32) -> (i32, i32) {
    %c0_i32 = arith.constant 0 : i32
    %c0_i32_0 = arith.constant 0 : i32
    %c0_i32_1 = arith.constant 0 : i32
    return %c0_i32, %c0_i32_0 : i32, i32
  }
  func.func @transform_20(%arg0: i32) -> (i32, i32) {
    %c0_i32 = arith.constant 0 : i32
    %c0_i32_0 = arith.constant 0 : i32
    %c0_i32_1 = arith.constant 0 : i32
    return %c0_i32, %c0_i32_0 : i32, i32
  }
  func.func @transform_21(%arg0: i32) -> (i32, i32) {
    %c0_i32 = arith.constant 0 : i32
    %c0_i32_0 = arith.constant 0 : i32
    %c0_i32_1 = arith.constant 0 : i32
    return %c0_i32, %c0_i32_0 : i32, i32
  }
  func.func @transform_22(%arg0: i32) -> (i32, i32) {
    %c0_i32 = arith.constant 0 : i32
    %c0_i32_0 = arith.constant 0 : i32
    return %arg0, %c0_i32 : i32, i32
  }
  func.func @transform_23(%arg0: i32) -> (i32, i32, i32) {
    %c0_i32 = arith.constant 0 : i32
    %c0_i32_0 = arith.constant 0 : i32
    %c0_i32_1 = arith.constant 0 : i32
    return %c0_i32, %arg0, %c0_i32_0 : i32, i32, i32
  }
  func.func @transform_24(%arg0: i32) -> (i32, i32) {
    %c0_i32 = arith.constant 0 : i32
    %c0_i32_0 = arith.constant 0 : i32
    return %arg0, %c0_i32 : i32, i32
  }
}

</mosaic_0001>

<llo_original>
// kernel: tpu_custom_call.1
$region0: #{tpu_custom_call.1}
  #allocation0 [shape = 'u32[]', space=smem, size = 0x4, offset = 0x4, fixed_abs, tag = 'smem constant byte address 0x4 - core index']
  #allocation1 [shape = 'u32[144,128]{1,0:T(1,128)}', space=vmem, size = 0x12000, scoped, tag = 'internal scratch']
  #allocation2 [shape = 'f32[1,1]{1,0:T(1,128)S(6)}', space=smem, size = 0x200, scoped, tag = 'scoped memory for tpu_custom_call.1']
  %s0 = inlined_call_operand.hbm [shape: s32[8,16], index: 0, kind: input, shape index: {}]
  %s1 = inlined_call_operand.hbm [shape: bf16[8,16], index: 1, kind: input, shape index: {}]
  %s2 = inlined_call_operand.hbm [shape: f32[2,8,32], index: 2, kind: input, shape index: {}]
  %s3 = inlined_call_operand.hbm [shape: f32[8,16,32], index: 3, kind: input, shape index: {}]
  %s4 = inlined_call_operand.hbm [shape: f32[8,16], index: 4, kind: input, shape index: {}]
  %s5 = inlined_call_operand.hbm [shape: bf16[32,161], index: 5, kind: input, shape index: {}]
  %s6 = inlined_call_operand.vmem [shape: bf16[32,64], index: 6, kind: input, shape index: {}]
  %s7 = inlined_call_operand.hbm [shape: bf16[32,161], index: 7, kind: input, shape index: {}]
  %s8 = inlined_call_operand.vmem [shape: bf16[16,160], index: 8, kind: input, shape index: {}]
  %s9 = inlined_call_operand.hbm [shape: bf16[32,96], index: 9, kind: input, shape index: {}]
  %s10 = inlined_call_operand.hbm [shape: bf16[32,96], index: 10, kind: input, shape index: {}]
  %s11 = inlined_call_operand.hbm [shape: bf16[32,64], index: 11, kind: input, shape index: {}]
  %s12 = inlined_call_operand.vmem [shape: f32[1,32], index: 12, kind: input, shape index: {}]
  %s13 = inlined_call_operand.vmem [shape: f32[1,32], index: 13, kind: input, shape index: {}]
  %s14 = inlined_call_operand.vmem [shape: f32[1,32], index: 14, kind: input, shape index: {}]
  %s15 = inlined_call_operand.vmem [shape: f32[1,32], index: 15, kind: input, shape index: {}]
  %s16 = inlined_call_operand.vmem [shape: f32[1,96], index: 16, kind: input, shape index: {}]
  %s17 = inlined_call_operand.vmem [shape: f32[1,96], index: 17, kind: input, shape index: {}]
  %s18 = inlined_call_operand.vmem [shape: f32[1,96], index: 18, kind: input, shape index: {}]
  %s19 = inlined_call_operand.vmem [shape: f32[1,96], index: 19, kind: input, shape index: {}]
  %s20 = inlined_call_operand.vmem [shape: f32[1,64], index: 20, kind: input, shape index: {}]
  %s21 = inlined_call_operand.<no memory space> [shape: f32[1,1], index: 21, kind: input, shape index: {}]
  %s22 = inlined_call_operand.hbm [shape: f32[8,64], index: 22, kind: output, shape index: {0}]
  %s23 = inlined_call_operand.hbm [shape: f32[2,8,32], index: 23, kind: output, shape index: {1}]
  %s24 = inlined_call_operand.hbm [shape: f32[8,16], index: 24, kind: output, shape index: {2}]
  %25 = xla_tuple %s22, %s23, %s24
  %s26 = sld [smem:[#allocation0]]
  $region154: #{tpu_custom_call.1} parent=0
    _
  %s28 = ssub.s32 1, %s26
  %s29 = scalar_select 0, %s28, %s26
  %30 = sst [smem:[#allocation2]] %s21
  $region1: #{tpu_custom_call.1} parent=0
    #allocation3 [shape = 'u8[4096]{0}', space=vmem, size = 0x1000, scoped, tag = 'input window, operand 0, single buffered']
    #allocation4 [shape = 's32[1]{0}', space=sflag, size = 0x4, scoped, tag = 'scoped memory for tpu_custom_call.1']
    #allocation5 [shape = 's32[1]{0}', space=sflag, size = 0x4, scoped, tag = 'scoped memory for tpu_custom_call.1']
    #allocation6 [shape = 'u8[2048]{0}', space=vmem, size = 0x800, scoped, tag = 'input window, operand 1, single buffered']
    #allocation7 [shape = 's32[1]{0}', space=sflag, size = 0x4, scoped, tag = 'scoped memory for tpu_custom_call.1']
    #allocation8 [shape = 'u8[8192]{0}', space=vmem, size = 0x2000, scoped, tag = 'input window, operand 2, single buffered']
    #allocation9 [shape = 'u8[65536]{0}', space=vmem, size = 0x10000, scoped, tag = 'input window, operand 3, single buffered']
    #allocation10 [shape = 's32[1]{0}', space=sflag, size = 0x4, scoped, tag = 'scoped memory for tpu_custom_call.1']
    #allocation11 [shape = 'u8[4096]{0}', space=vmem, size = 0x1000, scoped, tag = 'input window, operand 4, single buffered']
    #allocation12 [shape = 'u8[16384]{0}', space=vmem, size = 0x4000, scoped, tag = 'input window, operand 5, single buffered']
    #allocation13 [shape = 's32[1]{0}', space=sflag, size = 0x4, scoped, tag = 'scoped memory for tpu_custom_call.1']
    #allocation14 [shape = 'u8[16384]{0}', space=vmem, size = 0x4000, scoped, tag = 'input window, operand 7, single buffered']
    #allocation15 [shape = 'u8[8192]{0}', space=vmem, size = 0x2000, scoped, tag = 'input window, operand 9, single buffered']
    #allocation16 [shape = 's32[1]{0}', space=sflag, size = 0x4, scoped, tag = 'scoped memory for tpu_custom_call.1']
    #allocation17 [shape = 'u8[8192]{0}', space=vmem, size = 0x2000, scoped, tag = 'input window, operand 10, single buffered']
    #allocation18 [shape = 'u8[8192]{0}', space=vmem, size = 0x2000, scoped, tag = 'input window, operand 11, single buffered']
    #allocation19 [shape = 's32[1]{0}', space=sflag, size = 0x4, scoped, tag = 'scoped memory for tpu_custom_call.1']
    #allocation20 [shape = 'u8[4096]{0}', space=vmem, size = 0x1000, scoped, tag = 'output window, operand 0, single buffered']
    #allocation21 [shape = 'u8[8192]{0}', space=vmem, size = 0x2000, scoped, tag = 'output window, operand 1, single buffered']
    #allocation22 [shape = 's32[1]{0}', space=sflag, size = 0x4, scoped, tag = 'scoped memory for tpu_custom_call.1']
    #allocation23 [shape = 'u8[4096]{0}', space=vmem, size = 0x1000, scoped, tag = 'output window, operand 2, single buffered']
    %31 = vsyncpa [#allocation4], 0
    %32 = vsyncpa [#allocation7], 0
    %33 = vsyncpa [#allocation10], 0
    %34 = vsyncpa [#allocation13], 0
    %35 = vsyncpa [#allocation16], 0
    %36 = vsyncpa [#allocation19], 0
    %37 = vsyncpa [#allocation5], 0
    %38 = vsyncpa [#allocation22], 0
    // Predicated region
    $region2: #{tpu_custom_call.1} parent=1 // pred_check
      _
    $region3: #{tpu_custom_call.1} parent=1 // pred_check_branch
      %40 = sbr.rel (0) target = $region5
    $region4: #{tpu_custom_call.1} parent=1 // pred_region
      %s42 = ssub.s32 128, 128
      %43 = vsyncadd [#allocation4], %s42
      %s45 = sshll.u32 [#allocation3], 4
      %s46 = int_to_ptr.vmem [resolvable:$true] %s45
      %48 = dma.hbm_to_vmem [thread:$0]  %s0, 128, %s46, [#allocation4]
    $region5: #{tpu_custom_call.1} parent=1 // pred_fallthru
      _
    // Predicated region
    $region6: #{tpu_custom_call.1} parent=1 // pred_check
      _
    $region7: #{tpu_custom_call.1} parent=1 // pred_check_branch
      %50 = sbr.rel (0) target = $region9
    $region8: #{tpu_custom_call.1} parent=1 // pred_region
      %s52 = ssub.s32 64, 64
      %53 = vsyncadd [#allocation7], %s52
      %s55 = sshll.u32 [#allocation6], 4
      %s56 = int_to_ptr.vmem [resolvable:$true] %s55
      %58 = dma.hbm_to_vmem [thread:$0]  %s1, 64, %s56, [#allocation7]
    $region9: #{tpu_custom_call.1} parent=1 // pred_fallthru
      _
    // Predicated region
    $region10: #{tpu_custom_call.1} parent=1 // pred_check
      _
    $region11: #{tpu_custom_call.1} parent=1 // pred_check_branch
      %60 = sbr.rel (0) target = $region13
    $region12: #{tpu_custom_call.1} parent=1 // pred_region
      %s62 = ssub.s32 256, 256
      %63 = vsyncadd [#allocation7], %s62
      %s64 = sshll.u32 [#allocation8], 4
      %s65 = int_to_ptr.vmem [resolvable:$true] %s64
      %70 = dma.hbm_to_vmem [thread:$0]  %s2, 256, %s65, [#allocation7], 128, 128, 8
    $region13: #{tpu_custom_call.1} parent=1 // pred_fallthru
      _
    // Predicated region
    $region14: #{tpu_custom_call.1} parent=1 // pred_check
      _
    $region15: #{tpu_custom_call.1} parent=1 // pred_check_branch
      %72 = sbr.rel (0) target = $region17
    $region16: #{tpu_custom_call.1} parent=1 // pred_region
      %s74 = ssub.s32 2048, 2048
      %75 = vsyncadd [#allocation10], %s74
      %s76 = sshll.u32 [#allocation9], 4
      %s77 = int_to_ptr.vmem [resolvable:$true] %s76
      %82 = dma.hbm_to_vmem [thread:$0]  %s3, 2048, %s77, [#allocation10], 128, 128, 8
    $region17: #{tpu_custom_call.1} parent=1 // pred_fallthru
      _
    // Predicated region
    $region18: #{tpu_custom_call.1} parent=1 // pred_check
      _
    $region19: #{tpu_custom_call.1} parent=1 // pred_check_branch
      %84 = sbr.rel (0) target = $region21
    $region20: #{tpu_custom_call.1} parent=1 // pred_region
      %s86 = ssub.s32 128, 128
      %87 = vsyncadd [#allocation10], %s86
      %s89 = sshll.u32 [#allocation11], 4
      %s90 = int_to_ptr.vmem [resolvable:$true] %s89
      %92 = dma.hbm_to_vmem [thread:$0]  %s4, 128, %s90, [#allocation10]
    $region21: #{tpu_custom_call.1} parent=1 // pred_fallthru
      _
    // Predicated region
    $region22: #{tpu_custom_call.1} parent=1 // pred_check
      _
    $region23: #{tpu_custom_call.1} parent=1 // pred_check_branch
      %94 = sbr.rel (0) target = $region25
    $region24: #{tpu_custom_call.1} parent=1 // pred_region
      %s96 = ssub.s32 512, 512
      %97 = vsyncadd [#allocation13], %s96
      %s98 = sshll.u32 [#allocation12], 4
      %s99 = int_to_ptr.vmem [resolvable:$true] %s98
      %104 = dma.hbm_to_vmem [thread:$0]  %s5, 512, %s99, [#allocation13], 128, 128, 8
    $region25: #{tpu_custom_call.1} parent=1 // pred_fallthru
      _
    // Predicated region
    $region26: #{tpu_custom_call.1} parent=1 // pred_check
      _
    $region27: #{tpu_custom_call.1} parent=1 // pred_check_branch
      %106 = sbr.rel (0) target = $region29
    $region28: #{tpu_custom_call.1} parent=1 // pred_region
      _
    $region29: #{tpu_custom_call.1} parent=1 // pred_fallthru
      _
    // Predicated region
    $region30: #{tpu_custom_call.1} parent=1 // pred_check
      _
    $region31: #{tpu_custom_call.1} parent=1 // pred_check_branch
      %108 = sbr.rel (0) target = $region33
    $region32: #{tpu_custom_call.1} parent=1 // pred_region
      %s110 = ssub.s32 512, 512
      %111 = vsyncadd [#allocation13], %s110
      %s112 = sshll.u32 [#allocation14], 4
      %s113 = int_to_ptr.vmem [resolvable:$true] %s112
      %118 = dma.hbm_to_vmem [thread:$0]  %s7, 512, %s113, [#allocation13], 128, 128, 8
    $region33: #{tpu_custom_call.1} parent=1 // pred_fallthru
      _
    // Predicated region
    $region34: #{tpu_custom_call.1} parent=1 // pred_check
      _
    $region35: #{tpu_custom_call.1} parent=1 // pred_check_branch
      %120 = sbr.rel (0) target = $region37
    $region36: #{tpu_custom_call.1} parent=1 // pred_region
      _
    $region37: #{tpu_custom_call.1} parent=1 // pred_fallthru
      _
    // Predicated region
    $region38: #{tpu_custom_call.1} parent=1 // pred_check
      _
    $region39: #{tpu_custom_call.1} parent=1 // pred_check_branch
      %122 = sbr.rel (0) target = $region41
    $region40: #{tpu_custom_call.1} parent=1 // pred_region
      %s124 = ssub.s32 256, 256
      %125 = vsyncadd [#allocation16], %s124
      %s126 = sshll.u32 [#allocation15], 4
      %s127 = int_to_ptr.vmem [resolvable:$true] %s126
      %132 = dma.hbm_to_vmem [thread:$0]  %s9, 256, %s127, [#allocation16], 64, 64, 4
    $region41: #{tpu_custom_call.1} parent=1 // pred_fallthru
      _
    // Predicated region
    $region42: #{tpu_custom_call.1} parent=1 // pred_check
      _
    $region43: #{tpu_custom_call.1} parent=1 // pred_check_branch
      %134 = sbr.rel (0) target = $region45
    $region44: #{tpu_custom_call.1} parent=1 // pred_region
      %s136 = ssub.s32 256, 256
      %137 = vsyncadd [#allocation16], %s136
      %s138 = sshll.u32 [#allocation17], 4
      %s139 = int_to_ptr.vmem [resolvable:$true] %s138
      %144 = dma.hbm_to_vmem [thread:$0]  %s10, 256, %s139, [#allocation16], 64, 64, 4
    $region45: #{tpu_custom_call.1} parent=1 // pred_fallthru
      _
    // Predicated region
    $region46: #{tpu_custom_call.1} parent=1 // pred_check
      _
    $region47: #{tpu_custom_call.1} parent=1 // pred_check_branch
      %146 = sbr.rel (0) target = $region49
    $region48: #{tpu_custom_call.1} parent=1 // pred_region
      %s148 = ssub.s32 256, 256
      %149 = vsyncadd [#allocation19], %s148
      %s150 = sshll.u32 [#allocation18], 4
      %s151 = int_to_ptr.vmem [resolvable:$true] %s150
      %156 = dma.hbm_to_vmem [thread:$0]  %s11, 256, %s151, [#allocation19], 64, 64, 4
    $region49: #{tpu_custom_call.1} parent=1 // pred_fallthru
      _
    // Predicated region
    $region50: #{tpu_custom_call.1} parent=1 // pred_check
      _
    $region51: #{tpu_custom_call.1} parent=1 // pred_check_branch
      %158 = sbr.rel (0) target = $region53
    $region52: #{tpu_custom_call.1} parent=1 // pred_region
      _
    $region53: #{tpu_custom_call.1} parent=1 // pred_fallthru
      _
    // Predicated region
    $region54: #{tpu_custom_call.1} parent=1 // pred_check
      _
    $region55: #{tpu_custom_call.1} parent=1 // pred_check_branch
      %160 = sbr.rel (0) target = $region57
    $region56: #{tpu_custom_call.1} parent=1 // pred_region
      _
    $region57: #{tpu_custom_call.1} parent=1 // pred_fallthru
      _
    // Predicated region
    $region58: #{tpu_custom_call.1} parent=1 // pred_check
      _
    $region59: #{tpu_custom_call.1} parent=1 // pred_check_branch
      %162 = sbr.rel (0) target = $region61
    $region60: #{tpu_custom_call.1} parent=1 // pred_region
      _
    $region61: #{tpu_custom_call.1} parent=1 // pred_fallthru
      _
    // Predicated region
    $region62: #{tpu_custom_call.1} parent=1 // pred_check
      _
    $region63: #{tpu_custom_call.1} parent=1 // pred_check_branch
      %164 = sbr.rel (0) target = $region65
    $region64: #{tpu_custom_call.1} parent=1 // pred_region
      _
    $region65: #{tpu_custom_call.1} parent=1 // pred_fallthru
      _
    // Predicated region
    $region66: #{tpu_custom_call.1} parent=1 // pred_check
      _
    $region67: #{tpu_custom_call.1} parent=1 // pred_check_branch
      %166 = sbr.rel (0) target = $region69
    $region68: #{tpu_custom_call.1} parent=1 // pred_region
      _
    $region69: #{tpu_custom_call.1} parent=1 // pred_fallthru
      _
    // Predicated region
    $region70: #{tpu_custom_call.1} parent=1 // pred_check
      _
    $region71: #{tpu_custom_call.1} parent=1 // pred_check_branch
      %168 = sbr.rel (0) target = $region73
    $region72: #{tpu_custom_call.1} parent=1 // pred_region
      _
    $region73: #{tpu_custom_call.1} parent=1 // pred_fallthru
      _
    // Predicated region
    $region74: #{tpu_custom_call.1} parent=1 // pred_check
      _
    $region75: #{tpu_custom_call.1} parent=1 // pred_check_branch
      %170 = sbr.rel (0) target = $region77
    $region76: #{tpu_custom_call.1} parent=1 // pred_region
      _
    $region77: #{tpu_custom_call.1} parent=1 // pred_fallthru
      _
    // Predicated region
    $region78: #{tpu_custom_call.1} parent=1 // pred_check
      _
    $region79: #{tpu_custom_call.1} parent=1 // pred_check_branch
      %172 = sbr.rel (0) target = $region81
    $region80: #{tpu_custom_call.1} parent=1 // pred_region
      _
    $region81: #{tpu_custom_call.1} parent=1 // pred_fallthru
      _
    // Predicated region
    $region82: #{tpu_custom_call.1} parent=1 // pred_check
      _
    $region83: #{tpu_custom_call.1} parent=1 // pred_check_branch
      %174 = sbr.rel (0) target = $region85
    $region84: #{tpu_custom_call.1} parent=1 // pred_region
      _
    $region85: #{tpu_custom_call.1} parent=1 // pred_fallthru
      _
    // Predicated region
    $region86: #{tpu_custom_call.1} parent=1 // pred_check
      _
    $region87: #{tpu_custom_call.1} parent=1 // pred_check_branch
      %176 = sbr.rel (0) target = $region89
    $region88: #{tpu_custom_call.1} parent=1 // pred_region
      _
    $region89: #{tpu_custom_call.1} parent=1 // pred_fallthru
      _
    // Predicated region
    $region90: #{tpu_custom_call.1} parent=1 // pred_check
      _
    $region91: #{tpu_custom_call.1} parent=1 // pred_check_branch
      %178 = sbr.rel (0) target = $region93
    $region92: #{tpu_custom_call.1} parent=1 // pred_region
      %179 = dma.done [#allocation4], 128
    $region93: #{tpu_custom_call.1} parent=1 // pred_fallthru
      _
    // Predicated region
    $region94: #{tpu_custom_call.1} parent=1 // pred_check
      _
    $region95: #{tpu_custom_call.1} parent=1 // pred_check_branch
      %181 = sbr.rel (0) target = $region97
    $region96: #{tpu_custom_call.1} parent=1 // pred_region
      %182 = dma.done [#allocation7], 64
    $region97: #{tpu_custom_call.1} parent=1 // pred_fallthru
      _
    // Predicated region
    $region98: #{tpu_custom_call.1} parent=1 // pred_check
      _
    $region99: #{tpu_custom_call.1} parent=1 // pred_check_branch
      %184 = sbr.rel (0) target = $region101
    $region100: #{tpu_custom_call.1} parent=1 // pred_region
      %185 = dma.done [#allocation7], 256
    $region101: #{tpu_custom_call.1} parent=1 // pred_fallthru
      _
    // Predicated region
    $region102: #{tpu_custom_call.1} parent=1 // pred_check
      _
    $region103: #{tpu_custom_call.1} parent=1 // pred_check_branch
      %187 = sbr.rel (0) target = $region105
    $region104: #{tpu_custom_call.1} parent=1 // pred_region
      %188 = dma.done [#allocation10], 2048
    $region105: #{tpu_custom_call.1} parent=1 // pred_fallthru
      _
    // Predicated region
    $region106: #{tpu_custom_call.1} parent=1 // pred_check
      _
    $region107: #{tpu_custom_call.1} parent=1 // pred_check_branch
      %190 = sbr.rel (0) target = $region109
    $region108: #{tpu_custom_call.1} parent=1 // pred_region
      %191 = dma.done [#allocation10], 128
    $region109: #{tpu_custom_call.1} parent=1 // pred_fallthru
      _
    // Predicated region
    $region110: #{tpu_custom_call.1} parent=1 // pred_check
      _
    $region111: #{tpu_custom_call.1} parent=1 // pred_check_branch
      %193 = sbr.rel (0) target = $region113
    $region112: #{tpu_custom_call.1} parent=1 // pred_region
      %194 = dma.done [#allocation13], 512
    $region113: #{tpu_custom_call.1} parent=1 // pred_fallthru
      _
    // Predicated region
    $region114: #{tpu_custom_call.1} parent=1 // pred_check
      _
    $region115: #{tpu_custom_call.1} parent=1 // pred_check_branch
      %196 = sbr.rel (0) target = $region117
    $region116: #{tpu_custom_call.1} parent=1 // pred_region
      %197 = dma.done [#allocation13], 512
    $region117: #{tpu_custom_call.1} parent=1 // pred_fallthru
      _
    // Predicated region
    $region118: #{tpu_custom_call.1} parent=1 // pred_check
      _
    $region119: #{tpu_custom_call.1} parent=1 // pred_check_branch
      %199 = sbr.rel (0) target = $region121
    $region120: #{tpu_custom_call.1} parent=1 // pred_region
      %200 = dma.done [#allocation16], 256
    $region121: #{tpu_custom_call.1} parent=1 // pred_fallthru
      _
    // Predicated region
    $region122: #{tpu_custom_call.1} parent=1 // pred_check
      _
    $region123: #{tpu_custom_call.1} parent=1 // pred_check_branch
      %202 = sbr.rel (0) target = $region125
    $region124: #{tpu_custom_call.1} parent=1 // pred_region
      %203 = dma.done [#allocation16], 256
    $region125: #{tpu_custom_call.1} parent=1 // pred_fallthru
      _
    // Predicated region
    $region126: #{tpu_custom_call.1} parent=1 // pred_check
      _
    $region127: #{tpu_custom_call.1} parent=1 // pred_check_branch
      %205 = sbr.rel (0) target = $region129
    $region128: #{tpu_custom_call.1} parent=1 // pred_region
      %206 = dma.done [#allocation19], 256
    $region129: #{tpu_custom_call.1} parent=1 // pred_fallthru
      _
    %v208 = vld [vmem:[#allocation8] sm:$0xff]
    %s209 = scalar_lea.vmem [#allocation8], 8
    %v210 = vld [vmem:[%s209] sm:$0xff]
    %v211 = vld [vmem:[#allocation9] sm:$0xff]
    %v212 = vld [vmem:[#allocation9 + $0x8] sm:$0xff]
    %v213 = vld [vmem:[#allocation9 + $0x10] sm:$0xff]
    %v214 = vld [vmem:[#allocation9 + $0x18] sm:$0xff]
    %v215 = vld [vmem:[#allocation9 + $0x20] sm:$0xff]
    %v216 = vld [vmem:[#allocation9 + $0x28] sm:$0xff]
    %v217 = vld [vmem:[#allocation9 + $0x30] sm:$0xff]
    %v218 = vld [vmem:[#allocation9 + $0x38] sm:$0xff]
    %v219 = vld [vmem:[#allocation9 + $0x40] sm:$0xff]
    %v220 = vld [vmem:[#allocation9 + $0x48] sm:$0xff]
    %v221 = vld [vmem:[#allocation9 + $0x50] sm:$0xff]
    %v222 = vld [vmem:[#allocation9 + $0x58] sm:$0xff]
    %v223 = vld [vmem:[#allocation9 + $0x60] sm:$0xff]
    %v224 = vld [vmem:[#allocation9 + $0x68] sm:$0xff]
    %v225 = vld [vmem:[#allocation9 + $0x70] sm:$0xff]
    %v226 = vld [vmem:[#allocation9 + $0x78] sm:$0xff]
    %v227 = vld [vmem:[#allocation11] sm:$0xff]
    %v228 = vld [vmem:[#allocation6] sm:$0xf]
    %v229 = vpack.c.bf16 %v210, %v210
    %v230 = vld [vmem:[#allocation12] sm:$0xff]
    %v231 = vld [vmem:[#allocation12 + $0x8] sm:$0xff]
    %v232 = vld [vmem:[#allocation12 + $0x10] sm:$0xff]
    %v233 = vld [vmem:[#allocation12 + $0x18] sm:$0xff]
    %v238 = vunpack.c.l.b16 %v230
    %v239 = vunpack.c.h.b16 %v230
    %v240 = vunpack.c.l.b16 %v231
    %v241 = vunpack.c.h.b16 %v231
    %v242 = vunpack.c.l.b16 %v232
    %v243 = vunpack.c.h.b16 %v232
    %v244 = vunpack.c.l.b16 %v233
    %v245 = vunpack.c.h.b16 %v233
    %v246 = vpack.c.b16 %v240, %v238
    %v247 = vpack.c.b16 %v241, %v239
    %v248 = vpack.c.b16 %v244, %v242
    %v249 = vpack.c.b16 %v245, %v243
    %vm254 = vcmask 261120
    %v256 = vsel %vm254, %v229, 0
    %258 = vmatprep.subr.bf16.mxu0 %v247
    %259 = vmatpush1.bf16.msra.mxu0 %v246
    %260 = vmatprep.subr.bf16.mxu0 %v249
    %261 = vmatpush1.bf16.msra.mxu0 %v248
    %262 = vmatprep.subr.bf16.mxu0 0
    %263 = vmatpush1.bf16.msra.mxu0 0
    %264 = vmatprep.subr.bf16.mxu0 0
    %265 = vmatpush1.bf16.msra.mxu0 0
    %266 = vmatprep.subr.bf16.mxu0 0
    %267 = vmatpush1.bf16.msra.mxu0 0
    %268 = vmatprep.subr.bf16.mxu0 0
    %269 = vmatpush1.bf16.msra.mxu0 0
    %270 = vmatprep.subr.bf16.mxu0 0
    %271 = vmatpush1.bf16.msra.mxu0 0
    %272 = vmatprep.subr.bf16.mxu0 0
    %273 = vmatpush1.bf16.msra.mxu0 0
    %274 = vmatprep.subr.bf16.mxu0 0
    %275 = vmatpush1.bf16.msra.mxu0 0
    %276 = vmatprep.subr.bf16.mxu0 0
    %277 = vmatpush1.bf16.msra.mxu0 0
    %278 = vmatprep.subr.bf16.mxu0 0
    %279 = vmatpush1.bf16.msra.mxu0 0
    %280 = vmatprep.subr.bf16.mxu0 0
    %281 = vmatpush1.bf16.msra.mxu0 0
    %282 = vmatprep.subr.bf16.mxu0 0
    %283 = vmatpush1.bf16.msra.mxu0 0
    %284 = vmatprep.subr.bf16.mxu0 0
    %285 = vmatpush1.bf16.msra.mxu0 0
    %286 = vmatprep.subr.bf16.mxu0 0
    %287 = vmatpush1.bf16.msra.mxu0 0
    %288 = vmatprep.subr.bf16.mxu0 0
    %289 = vmatpush1.bf16.msra.mxu0 0
    %290 = vmatprep.mubr.bf16.mxu0 0
    %291 = vmatmul.mubr.bf16.gmra.mrb[0].mxu0 %v256
    %v292 = vpop.f32.mrb[0].mxu0
    %v293 = vadd.f32 0.0, %v292
    %v294 = vpop.f32.mrb[0].mxu0
    %v295 = vadd.f32 0.0, %v294
    %v296 = vpop.f32.mrb[0].mxu0
    %v297 = vpop.f32.mrb[0].mxu0
    %298 = vdwg.mxu0
    %v299 = vld [vmem:[%s19] sm:$0x1]
    %v301 = vlaneseq
    %v302 = vshrl.u32 %v301, 7
    %v303 = vsub.s32 0, %v302
    %v304 = vrot.slane %v299, %v303
    %305 = vrot.lane.b32.xlu0 %v304, 64
    %v306 = vpop.permute.xlu0 %305
    %v308 = vadd.f32 %v293, %v306
    %v309 = vadd.f32 %v295, %v306
    %v310 = vpack.c.bf16 %v212, %v211
    %v311 = vpack.c.bf16 %v214, %v213
    %v312 = vpack.c.bf16 %v216, %v215
    %v313 = vpack.c.bf16 %v218, %v217
    %v314 = vpack.c.bf16 %v220, %v219
    %v315 = vpack.c.bf16 %v222, %v221
    %v316 = vpack.c.bf16 %v224, %v223
    %v317 = vpack.c.bf16 %v226, %v225
    %v318 = vld [vmem:[%s6] sm:$0xf]
    %v319 = vld [vmem:[%s6 + $0x4] sm:$0xf]
    %v320 = vld [vmem:[%s6 + $0x8] sm:$0xf]
    %v321 = vld [vmem:[%s6 + $0xc] sm:$0xf]
    %v326 = vunpack.c.l.b16 %v318
    %v327 = vunpack.c.l.b16 %v319
    %v328 = vunpack.c.l.b16 %v320
    %v329 = vunpack.c.l.b16 %v321
    %v330 = vpack.c.b16 %v327, %v326
    %v331 = vpack.c.b16 %v329, %v328
    %v335 = vsel %vm254, %v310, 0
    %v338 = vsel %vm254, %v311, 0
    %v341 = vsel %vm254, %v312, 0
    %v344 = vsel %vm254, %v313, 0
    %v347 = vsel %vm254, %v314, 0
    %v350 = vsel %vm254, %v315, 0
    %v353 = vsel %vm254, %v316, 0
    %v356 = vsel %vm254, %v317, 0
    %358 = vmatprep.subr.bf16.mxu0 0
    %359 = vmatpush1.bf16.msra.mxu0 %v330
    %360 = vmatprep.subr.bf16.mxu0 0
    %361 = vmatpush1.bf16.msra.mxu0 %v331
    %362 = vmatprep.subr.bf16.mxu0 0
    %363 = vmatpush1.bf16.msra.mxu0 0
    %364 = vmatprep.subr.bf16.mxu0 0
    %365 = vmatpush1.bf16.msra.mxu0 0
    %366 = vmatprep.subr.bf16.mxu0 0
    %367 = vmatpush1.bf16.msra.mxu0 0
    %368 = vmatprep.subr.bf16.mxu0 0
    %369 = vmatpush1.bf16.msra.mxu0 0
    %370 = vmatprep.subr.bf16.mxu0 0
    %371 = vmatpush1.bf16.msra.mxu0 0
    %372 = vmatprep.subr.bf16.mxu0 0
    %373 = vmatpush1.bf16.msra.mxu0 0
    %374 = vmatprep.subr.bf16.mxu0 0
    %375 = vmatpush1.bf16.msra.mxu0 0
    %376 = vmatprep.subr.bf16.mxu0 0
    %377 = vmatpush1.bf16.msra.mxu0 0
    %378 = vmatprep.subr.bf16.mxu0 0
    %379 = vmatpush1.bf16.msra.mxu0 0
    %380 = vmatprep.subr.bf16.mxu0 0
    %381 = vmatpush1.bf16.msra.mxu0 0
    %382 = vmatprep.subr.bf16.mxu0 0
    %383 = vmatpush1.bf16.msra.mxu0 0
    %384 = vmatprep.subr.bf16.mxu0 0
    %385 = vmatpush1.bf16.msra.mxu0 0
    %386 = vmatprep.subr.bf16.mxu0 0
    %387 = vmatpush1.bf16.msra.mxu0 0
    %388 = vmatprep.subr.bf16.mxu0 0
    %389 = vmatpush1.bf16.msra.mxu0 0
    %390 = vmatprep.mubr.bf16.mxu0 0
    %391 = vmatmul.mubr.bf16.gmra.mrb[0].mxu0 %v335
    %v392 = vpop.f32.mrb[0].mxu0
    %v393 = vadd.f32 0.0, %v392
    %v394 = vpop.f32.mrb[0].mxu0
    %v395 = vpop.f32.mrb[0].mxu0
    %v396 = vadd.f32 0.0, %v395
    %v397 = vpop.f32.mrb[0].mxu0
    %398 = vmatprep.mubr.bf16.mxu0 0
    %399 = vmatmul.mubr.bf16.gmra.mrb[0].mxu0 %v338
    %v400 = vpop.f32.mrb[0].mxu0
    %v401 = vadd.f32 0.0, %v400
    %v402 = vpop.f32.mrb[0].mxu0
    %v403 = vpop.f32.mrb[0].mxu0
    %v404 = vadd.f32 0.0, %v403
    %v405 = vpop.f32.mrb[0].mxu0
    %406 = vmatprep.mubr.bf16.mxu0 0
    %407 = vmatmul.mubr.bf16.gmra.mrb[0].mxu0 %v341
    %v408 = vpop.f32.mrb[0].mxu0
    %v409 = vadd.f32 0.0, %v408
    %v410 = vpop.f32.mrb[0].mxu0
    %v411 = vpop.f32.mrb[0].mxu0
    %v412 = vadd.f32 0.0, %v411
    %v413 = vpop.f32.mrb[0].mxu0
    %414 = vmatprep.mubr.bf16.mxu0 0
    %415 = vmatmul.mubr.bf16.gmra.mrb[0].mxu0 %v344
    %v416 = vpop.f32.mrb[0].mxu0
    %v417 = vadd.f32 0.0, %v416
    %v418 = vpop.f32.mrb[0].mxu0
    %v419 = vpop.f32.mrb[0].mxu0
    %v420 = vadd.f32 0.0, %v419
    %v421 = vpop.f32.mrb[0].mxu0
    %422 = vmatprep.mubr.bf16.mxu0 0
    %423 = vmatmul.mubr.bf16.gmra.mrb[0].mxu0 %v347
    %v424 = vpop.f32.mrb[0].mxu0
    %v425 = vadd.f32 0.0, %v424
    %v426 = vpop.f32.mrb[0].mxu0
    %v427 = vpop.f32.mrb[0].mxu0
    %v428 = vadd.f32 0.0, %v427
    %v429 = vpop.f32.mrb[0].mxu0
    %430 = vmatprep.mubr.bf16.mxu0 0
    %431 = vmatmul.mubr.bf16.gmra.mrb[0].mxu0 %v350
    %v432 = vpop.f32.mrb[0].mxu0
    %v433 = vadd.f32 0.0, %v432
    %v434 = vpop.f32.mrb[0].mxu0
    %v435 = vpop.f32.mrb[0].mxu0
    %v436 = vadd.f32 0.0, %v435
    %v437 = vpop.f32.mrb[0].mxu0
    %438 = vmatprep.mubr.bf16.mxu0 0
    %439 = vmatmul.mubr.bf16.gmra.mrb[0].mxu0 %v353
    %v440 = vpop.f32.mrb[0].mxu0
    %v441 = vadd.f32 0.0, %v440
    %v442 = vpop.f32.mrb[0].mxu0
    %v443 = vpop.f32.mrb[0].mxu0
    %v444 = vadd.f32 0.0, %v443
    %v445 = vpop.f32.mrb[0].mxu0
    %446 = vmatprep.mubr.bf16.mxu0 0
    %447 = vmatmul.mubr.bf16.gmra.mrb[0].mxu0 %v356
    %v448 = vpop.f32.mrb[0].mxu0
    %v449 = vadd.f32 0.0, %v448
    %v450 = vpop.f32.mrb[0].mxu0
    %v451 = vpop.f32.mrb[0].mxu0
    %v452 = vadd.f32 0.0, %v451
    %v453 = vpop.f32.mrb[0].mxu0
    %454 = vdwg.mxu0
    %v455 = vld [vmem:[%s14] sm:$0x1]
    %v456 = vld [vmem:[%s12] sm:$0x1]
    %v458 = vcombine.high %v293, %v293
    %v460 = vunpack.c.l.s4 1966171168
    %v461 = vunpack.c.0.s8 %v460
    %v462 = vlaneseq
    %v463 = vshrl.u32 %v462, 7
    %v464 = vsub.s32 %v461, %v463
    %v465 = vrot.slane %v293, %v464
    %v467 = vunpack.c.l.s4 1966171168
    %v468 = vunpack.c.0.s8 %v467
    %v469 = vlaneseq
    %v470 = vshrl.u32 %v469, 7
    %v471 = vsub.s32 %v468, %v470
    %v472 = vrot.slane %v458, %v471
    %v473 = vcombine.high %v465, %v465
    %v474 = vcombine.high %v472, %v472
    %v476 = vunpack.c.l.s4 1966171168
    %v477 = vunpack.c.0.s8 %v476
    %v478 = vlaneseq
    %v479 = vshrl.u32 %v478, 7
    %v480 = vsub.s32 %v477, %v479
    %v481 = vrot.slane %v465, %v480
    %v483 = vunpack.c.l.s4 1966171168
    %v484 = vunpack.c.0.s8 %v483
    %v485 = vlaneseq
    %v486 = vshrl.u32 %v485, 7
    %v487 = vsub.s32 %v484, %v486
    %v488 = vrot.slane %v472, %v487
    %v490 = vunpack.c.l.s4 1966171168
    %v491 = vunpack.c.0.s8 %v490
    %v492 = vlaneseq
    %v493 = vshrl.u32 %v492, 7
    %v494 = vsub.s32 %v491, %v493
    %v495 = vrot.slane %v473, %v494
    %v497 = vunpack.c.l.s4 1966171168
    %v498 = vunpack.c.0.s8 %v497
    %v499 = vlaneseq
    %v500 = vshrl.u32 %v499, 7
    %v501 = vsub.s32 %v498, %v500
    %v502 = vrot.slane %v474, %v501
    %v503 = vcombine.high %v481, %v481
    %v504 = vcombine.high %v488, %v488
    %v505 = vcombine.high %v495, %v495
    %v506 = vcombine.high %v502, %v502
    %v507 = vlaneseq
    %v508 = vshrl.u32 %v507, 7
    %v509 = vsub.s32 0, %v508
    %v510 = vrot.slane %v481, %v509
    %v511 = vlaneseq
    %v512 = vshrl.u32 %v511, 7
    %v513 = vsub.s32 0, %v512
    %v514 = vrot.slane %v495, %v513
    %v515 = vlaneseq
    %v516 = vshrl.u32 %v515, 7
    %v517 = vsub.s32 0, %v516
    %v518 = vrot.slane %v503, %v517
    %v519 = vlaneseq
    %v520 = vshrl.u32 %v519, 7
    %v521 = vsub.s32 0, %v520
    %v522 = vrot.slane %v505, %v521
    %v523 = vlaneseq
    %v524 = vshrl.u32 %v523, 7
    %v525 = vsub.s32 0, %v524
    %v526 = vrot.slane %v488, %v525
    %v527 = vlaneseq
    %v528 = vshrl.u32 %v527, 7
    %v529 = vsub.s32 0, %v528
    %v530 = vrot.slane %v502, %v529
    %v531 = vlaneseq
    %v532 = vshrl.u32 %v531, 7
    %v533 = vsub.s32 0, %v532
    %v534 = vrot.slane %v504, %v533
    %v535 = vlaneseq
    %v536 = vshrl.u32 %v535, 7
    %v537 = vsub.s32 0, %v536
    %v538 = vrot.slane %v506, %v537
    %v547 = vadd.f32 %v393, %v510
    %v548 = vadd.f32 %v396, %v510
    %v549 = vadd.f32 %v401, %v514
    %v550 = vadd.f32 %v404, %v514
    %v551 = vadd.f32 %v409, %v518
    %v552 = vadd.f32 %v412, %v518
    %v553 = vadd.f32 %v417, %v522
    %v554 = vadd.f32 %v420, %v522
    %v555 = vadd.f32 %v425, %v526
    %v556 = vadd.f32 %v428, %v526
    %v557 = vadd.f32 %v433, %v530
    %v558 = vadd.f32 %v436, %v530
    %v559 = vadd.f32 %v441, %v534
    %v560 = vadd.f32 %v444, %v534
    %v561 = vadd.f32 %v449, %v538
    %v562 = vadd.f32 %v452, %v538
    %v564 = vlaneseq
    %v565 = vshrl.u32 %v564, 7
    %v566 = vsub.s32 0, %v565
    %v567 = vrot.slane %v455, %v566
    %v569 = vadd.f32 %v547, %v567
    %v570 = vadd.f32 %v548, %v567
    %v571 = vadd.f32 %v549, %v567
    %v572 = vadd.f32 %v550, %v567
    %v573 = vadd.f32 %v551, %v567
    %v574 = vadd.f32 %v552, %v567
    %v575 = vadd.f32 %v553, %v567
    %v576 = vadd.f32 %v554, %v567
    %v577 = vadd.f32 %v555, %v567
    %v578 = vadd.f32 %v556, %v567
    %v579 = vadd.f32 %v557, %v567
    %v580 = vadd.f32 %v558, %v567
    %v581 = vadd.f32 %v559, %v567
    %v582 = vadd.f32 %v560, %v567
    %v583 = vadd.f32 %v561, %v567
    %v584 = vadd.f32 %v562, %v567
    %v585 = vtanh.pop %v569
    %v586 = vtanh.pop %v570
    %v587 = vtanh.pop %v571
    %v588 = vtanh.pop %v572
    %v589 = vtanh.pop %v573
    %v590 = vtanh.pop %v574
    %v591 = vtanh.pop %v575
    %v592 = vtanh.pop %v576
    %v593 = vtanh.pop %v577
    %v594 = vtanh.pop %v578
    %v595 = vtanh.pop %v579
    %v596 = vtanh.pop %v580
    %v597 = vtanh.pop %v581
    %v598 = vtanh.pop %v582
    %v599 = vtanh.pop %v583
    %v600 = vtanh.pop %v584
    %v602 = vlaneseq
    %v603 = vshrl.u32 %v602, 7
    %v604 = vsub.s32 0, %v603
    %v605 = vrot.slane %v456, %v604
    %v607 = vmul.f32 %v585, %v605
    %v608 = vmul.f32 %v586, %v605
    %v609 = vmul.f32 %v587, %v605
    %v610 = vmul.f32 %v588, %v605
    %v611 = vmul.f32 %v589, %v605
    %v612 = vmul.f32 %v590, %v605
    %v613 = vmul.f32 %v591, %v605
    %v614 = vmul.f32 %v592, %v605
    %v615 = vmul.f32 %v593, %v605
    %v616 = vmul.f32 %v594, %v605
    %v617 = vmul.f32 %v595, %v605
    %v618 = vmul.f32 %v596, %v605
    %v619 = vmul.f32 %v597, %v605
    %v620 = vmul.f32 %v598, %v605
    %v621 = vmul.f32 %v599, %v605
    %v622 = vmul.f32 %v600, %v605
    %v623 = vsel %vm254, %v607, 0.0
    %624 = vadd.xlane.f32.xlu0 %v623
    %v625 = vpop.xlane.xlu0 %624
    %v626 = vsel %vm254, %v608, 0.0
    %627 = vadd.xlane.f32.xlu0 %v626
    %v628 = vpop.xlane.xlu0 %627
    %v629 = vsel %vm254, %v609, 0.0
    %630 = vadd.xlane.f32.xlu0 %v629
    %v631 = vpop.xlane.xlu0 %630
    %v632 = vsel %vm254, %v610, 0.0
    %633 = vadd.xlane.f32.xlu0 %v632
    %v634 = vpop.xlane.xlu0 %633
    %v635 = vsel %vm254, %v611, 0.0
    %636 = vadd.xlane.f32.xlu0 %v635
    %v637 = vpop.xlane.xlu0 %636
    %v638 = vsel %vm254, %v612, 0.0
    %639 = vadd.xlane.f32.xlu0 %v638
    %v640 = vpop.xlane.xlu0 %639
    %v641 = vsel %vm254, %v613, 0.0
    %642 = vadd.xlane.f32.xlu0 %v641
    %v643 = vpop.xlane.xlu0 %642
    %v644 = vsel %vm254, %v614, 0.0
    %645 = vadd.xlane.f32.xlu0 %v644
    %v646 = vpop.xlane.xlu0 %645
    %v647 = vsel %vm254, %v615, 0.0
    %648 = vadd.xlane.f32.xlu0 %v647
    %v649 = vpop.xlane.xlu0 %648
    %v650 = vsel %vm254, %v616, 0.0
    %651 = vadd.xlane.f32.xlu0 %v650
    %v652 = vpop.xlane.xlu0 %651
    %v653 = vsel %vm254, %v617, 0.0
    %654 = vadd.xlane.f32.xlu0 %v653
    %v655 = vpop.xlane.xlu0 %654
    %v656 = vsel %vm254, %v618, 0.0
    %657 = vadd.xlane.f32.xlu0 %v656
    %v658 = vpop.xlane.xlu0 %657
    %v659 = vsel %vm254, %v619, 0.0
    %660 = vadd.xlane.f32.xlu0 %v659
    %v661 = vpop.xlane.xlu0 %660
    %v662 = vsel %vm254, %v620, 0.0
    %663 = vadd.xlane.f32.xlu0 %v662
    %v664 = vpop.xlane.xlu0 %663
    %v665 = vsel %vm254, %v621, 0.0
    %666 = vadd.xlane.f32.xlu0 %v665
    %v667 = vpop.xlane.xlu0 %666
    %v668 = vsel %vm254, %v622, 0.0
    %669 = vadd.xlane.f32.xlu0 %v668
    %v670 = vpop.xlane.xlu0 %669
    %vm671 = vcmp.ne.f32.partialorder %v227, 0.0
    %v688 = vlaneseq
    %v689 = vand.u32 %v688, 127
    %v690 = vlaneseq
    %v691 = vshrl.u32 %v690, 7
    %v692 = vsub.s32 %v689, %v691
    %v693 = vrot.slane %v625, %v692
    %v694 = vadd.s32 %v689, 4294967288
    %v695 = vlaneseq
    %v696 = vshrl.u32 %v695, 7
    %v697 = vsub.s32 %v694, %v696
    %v698 = vrot.slane %v628, %v697
    %vm699 = vcmask 130112
    %v700 = vsel %vm699, %v698, %v693
    %v701 = vlaneseq
    %v702 = vshrl.u32 %v701, 7
    %v703 = vsub.s32 %v689, %v702
    %v704 = vrot.slane %v631, %v703
    %v705 = vlaneseq
    %v706 = vshrl.u32 %v705, 7
    %v707 = vsub.s32 %v694, %v706
    %v708 = vrot.slane %v634, %v707
    %v709 = vsel %vm699, %v708, %v704
    %v710 = vlaneseq
    %v711 = vshrl.u32 %v710, 7
    %v712 = vsub.s32 %v689, %v711
    %v713 = vrot.slane %v637, %v712
    %v714 = vlaneseq
    %v715 = vshrl.u32 %v714, 7
    %v716 = vsub.s32 %v694, %v715
    %v717 = vrot.slane %v640, %v716
    %v718 = vsel %vm699, %v717, %v713
    %v719 = vlaneseq
    %v720 = vshrl.u32 %v719, 7
    %v721 = vsub.s32 %v689, %v720
    %v722 = vrot.slane %v643, %v721
    %v723 = vlaneseq
    %v724 = vshrl.u32 %v723, 7
    %v725 = vsub.s32 %v694, %v724
    %v726 = vrot.slane %v646, %v725
    %v727 = vsel %vm699, %v726, %v722
    %v728 = vlaneseq
    %v729 = vshrl.u32 %v728, 7
    %v730 = vsub.s32 %v689, %v729
    %v731 = vrot.slane %v649, %v730
    %v732 = vlaneseq
    %v733 = vshrl.u32 %v732, 7
    %v734 = vsub.s32 %v694, %v733
    %v735 = vrot.slane %v652, %v734
    %v736 = vsel %vm699, %v735, %v731
    %v737 = vlaneseq
    %v738 = vshrl.u32 %v737, 7
    %v739 = vsub.s32 %v689, %v738
    %v740 = vrot.slane %v655, %v739
    %v741 = vlaneseq
    %v742 = vshrl.u32 %v741, 7
    %v743 = vsub.s32 %v694, %v742
    %v744 = vrot.slane %v658, %v743
    %v745 = vsel %vm699, %v744, %v740
    %v746 = vlaneseq
    %v747 = vshrl.u32 %v746, 7
    %v748 = vsub.s32 %v689, %v747
    %v749 = vrot.slane %v661, %v748
    %v750 = vlaneseq
    %v751 = vshrl.u32 %v750, 7
    %v752 = vsub.s32 %v694, %v751
    %v753 = vrot.slane %v664, %v752
    %v754 = vsel %vm699, %v753, %v749
    %v755 = vlaneseq
    %v756 = vshrl.u32 %v755, 7
    %v757 = vsub.s32 %v689, %v756
    %v758 = vrot.slane %v667, %v757
    %v759 = vlaneseq
    %v760 = vshrl.u32 %v759, 7
    %v761 = vsub.s32 %v694, %v760
    %v762 = vrot.slane %v670, %v761
    %v763 = vsel %vm699, %v762, %v758
    %vm764 = vcmask 1041409
    %v765 = vsel %vm764, %v709, %v700
    %vm766 = vcmask 1042434
    %v767 = vsel %vm766, %v718, %v765
    %vm768 = vcmask 1043459
    %v769 = vsel %vm768, %v727, %v767
    %vm770 = vcmask 1044484
    %v771 = vsel %vm770, %v736, %v769
    %vm772 = vcmask 1045509
    %v773 = vsel %vm772, %v745, %v771
    %vm774 = vcmask 1046534
    %v775 = vsel %vm774, %v754, %v773
    %vm776 = vcmask 1047559
    %v777 = vsel %vm776, %v763, %v775
    %v779 = vsel %vm671, %v777, -1e+10
    %vm780 = vcmask 130048
    %v781 = vsel %vm780, %v779, -inf
    %782 = vmax.xlane.f32.xlu0 %v781
    %v783 = vpop.xlane.xlu0 %782
    %v784 = vsub.f32 %v779, %v783
    %v785 = vmul.f32 %v784, 1.442695
    %v786 = vpow.pop %v785
    %v787 = vsel %vm780, %v786, 0.0
    %788 = vadd.xlane.f32.xlu0 %v787
    %v789 = vpop.xlane.xlu0 %788
    %v790 = vrcp.pop %v789
    %v791 = vmul.f32 %v786, %v790
    %v792 = vld [vmem:[%s15] sm:$0x1]
    %v793 = vld [vmem:[%s13] sm:$0x1]
    %v795 = vlaneseq
    %v796 = vshrl.u32 %v795, 7
    %v797 = vsub.s32 0, %v796
    %v798 = vrot.slane %v792, %v797
    %799 = vrot.lane.b32.xlu0 %v798, 32
    %v800 = vpop.permute.xlu0 %799
    %v802 = vadd.f32 %v547, %v800
    %v803 = vadd.f32 %v548, %v800
    %v804 = vadd.f32 %v549, %v800
    %v805 = vadd.f32 %v550, %v800
    %v806 = vadd.f32 %v551, %v800
    %v807 = vadd.f32 %v552, %v800
    %v808 = vadd.f32 %v553, %v800
    %v809 = vadd.f32 %v554, %v800
    %v810 = vadd.f32 %v555, %v800
    %v811 = vadd.f32 %v556, %v800
    %v812 = vadd.f32 %v557, %v800
    %v813 = vadd.f32 %v558, %v800
    %v814 = vadd.f32 %v559, %v800
    %v815 = vadd.f32 %v560, %v800
    %v816 = vadd.f32 %v561, %v800
    %v817 = vadd.f32 %v562, %v800
    %v818 = vtanh.pop %v802
    %v819 = vtanh.pop %v803
    %v820 = vtanh.pop %v804
    %v821 = vtanh.pop %v805
    %v822 = vtanh.pop %v806
    %v823 = vtanh.pop %v807
    %v824 = vtanh.pop %v808
    %v825 = vtanh.pop %v809
    %v826 = vtanh.pop %v810
    %v827 = vtanh.pop %v811
    %v828 = vtanh.pop %v812
    %v829 = vtanh.pop %v813
    %v830 = vtanh.pop %v814
    %v831 = vtanh.pop %v815
    %v832 = vtanh.pop %v816
    %v833 = vtanh.pop %v817
    %v835 = vlaneseq
    %v836 = vshrl.u32 %v835, 7
    %v837 = vsub.s32 0, %v836
    %v838 = vrot.slane %v793, %v837
    %839 = vrot.lane.b32.xlu0 %v838, 32
    %v840 = vpop.permute.xlu0 %839
    %v842 = vmul.f32 %v818, %v840
    %v843 = vmul.f32 %v819, %v840
    %v844 = vmul.f32 %v820, %v840
    %v845 = vmul.f32 %v821, %v840
    %v846 = vmul.f32 %v822, %v840
    %v847 = vmul.f32 %v823, %v840
    %v848 = vmul.f32 %v824, %v840
    %v849 = vmul.f32 %v825, %v840
    %v850 = vmul.f32 %v826, %v840
    %v851 = vmul.f32 %v827, %v840
    %v852 = vmul.f32 %v828, %v840
    %v853 = vmul.f32 %v829, %v840
    %v854 = vmul.f32 %v830, %v840
    %v855 = vmul.f32 %v831, %v840
    %v856 = vmul.f32 %v832, %v840
    %v857 = vmul.f32 %v833, %v840
    %874 = vrot.lane.b32.xlu0 %v842, 96
    %v875 = vpop.permute.xlu0 %874
    %876 = vrot.lane.b32.xlu0 %v843, 96
    %v877 = vpop.permute.xlu0 %876
    %878 = vrot.lane.b32.xlu0 %v844, 96
    %v879 = vpop.permute.xlu0 %878
    %880 = vrot.lane.b32.xlu0 %v845, 96
    %v881 = vpop.permute.xlu0 %880
    %882 = vrot.lane.b32.xlu0 %v846, 96
    %v883 = vpop.permute.xlu0 %882
    %884 = vrot.lane.b32.xlu0 %v847, 96
    %v885 = vpop.permute.xlu0 %884
    %886 = vrot.lane.b32.xlu0 %v848, 96
    %v887 = vpop.permute.xlu0 %886
    %888 = vrot.lane.b32.xlu0 %v849, 96
    %v889 = vpop.permute.xlu0 %888
    %890 = vrot.lane.b32.xlu0 %v850, 96
    %v891 = vpop.permute.xlu0 %890
    %892 = vrot.lane.b32.xlu0 %v851, 96
    %v893 = vpop.permute.xlu0 %892
    %894 = vrot.lane.b32.xlu0 %v852, 96
    %v895 = vpop.permute.xlu0 %894
    %896 = vrot.lane.b32.xlu0 %v853, 96
    %v897 = vpop.permute.xlu0 %896
    %898 = vrot.lane.b32.xlu0 %v854, 96
    %v899 = vpop.permute.xlu0 %898
    %900 = vrot.lane.b32.xlu0 %v855, 96
    %v901 = vpop.permute.xlu0 %900
    %902 = vrot.lane.b32.xlu0 %v856, 96
    %v903 = vpop.permute.xlu0 %902
    %904 = vrot.lane.b32.xlu0 %v857, 96
    %v905 = vpop.permute.xlu0 %904
    %v922 = vsel %vm254, %v875, 0.0
    %923 = vadd.xlane.f32.xlu0 %v922
    %v924 = vpop.xlane.xlu0 %923
    %v925 = vsel %vm254, %v877, 0.0
    %926 = vadd.xlane.f32.xlu0 %v925
    %v927 = vpop.xlane.xlu0 %926
    %v928 = vsel %vm254, %v879, 0.0
    %929 = vadd.xlane.f32.xlu0 %v928
    %v930 = vpop.xlane.xlu0 %929
    %v931 = vsel %vm254, %v881, 0.0
    %932 = vadd.xlane.f32.xlu0 %v931
    %v933 = vpop.xlane.xlu0 %932
    %v934 = vsel %vm254, %v883, 0.0
    %935 = vadd.xlane.f32.xlu0 %v934
    %v936 = vpop.xlane.xlu0 %935
    %v937 = vsel %vm254, %v885, 0.0
    %938 = vadd.xlane.f32.xlu0 %v937
    %v939 = vpop.xlane.xlu0 %938
    %v940 = vsel %vm254, %v887, 0.0
    %941 = vadd.xlane.f32.xlu0 %v940
    %v942 = vpop.xlane.xlu0 %941
    %v943 = vsel %vm254, %v889, 0.0
    %944 = vadd.xlane.f32.xlu0 %v943
    %v945 = vpop.xlane.xlu0 %944
    %v946 = vsel %vm254, %v891, 0.0
    %947 = vadd.xlane.f32.xlu0 %v946
    %v948 = vpop.xlane.xlu0 %947
    %v949 = vsel %vm254, %v893, 0.0
    %950 = vadd.xlane.f32.xlu0 %v949
    %v951 = vpop.xlane.xlu0 %950
    %v952 = vsel %vm254, %v895, 0.0
    %953 = vadd.xlane.f32.xlu0 %v952
    %v954 = vpop.xlane.xlu0 %953
    %v955 = vsel %vm254, %v897, 0.0
    %956 = vadd.xlane.f32.xlu0 %v955
    %v957 = vpop.xlane.xlu0 %956
    %v958 = vsel %vm254, %v899, 0.0
    %959 = vadd.xlane.f32.xlu0 %v958
    %v960 = vpop.xlane.xlu0 %959
    %v961 = vsel %vm254, %v901, 0.0
    %962 = vadd.xlane.f32.xlu0 %v961
    %v963 = vpop.xlane.xlu0 %962
    %v964 = vsel %vm254, %v903, 0.0
    %965 = vadd.xlane.f32.xlu0 %v964
    %v966 = vpop.xlane.xlu0 %965
    %v967 = vsel %vm254, %v905, 0.0
    %968 = vadd.xlane.f32.xlu0 %v967
    %v969 = vpop.xlane.xlu0 %968
    %v986 = vlaneseq
    %v987 = vshrl.u32 %v986, 7
    %v988 = vsub.s32 %v689, %v987
    %v989 = vrot.slane %v924, %v988
    %v990 = vlaneseq
    %v991 = vshrl.u32 %v990, 7
    %v992 = vsub.s32 %v694, %v991
    %v993 = vrot.slane %v927, %v992
    %v994 = vsel %vm699, %v993, %v989
    %v995 = vlaneseq
    %v996 = vshrl.u32 %v995, 7
    %v997 = vsub.s32 %v689, %v996
    %v998 = vrot.slane %v930, %v997
    %v999 = vlaneseq
    %v1000 = vshrl.u32 %v999, 7
    %v1001 = vsub.s32 %v694, %v1000
    %v1002 = vrot.slane %v933, %v1001
    %v1003 = vsel %vm699, %v1002, %v998
    %v1004 = vlaneseq
    %v1005 = vshrl.u32 %v1004, 7
    %v1006 = vsub.s32 %v689, %v1005
    %v1007 = vrot.slane %v936, %v1006
    %v1008 = vlaneseq
    %v1009 = vshrl.u32 %v1008, 7
    %v1010 = vsub.s32 %v694, %v1009
    %v1011 = vrot.slane %v939, %v1010
    %v1012 = vsel %vm699, %v1011, %v1007
    %v1013 = vlaneseq
    %v1014 = vshrl.u32 %v1013, 7
    %v1015 = vsub.s32 %v689, %v1014
    %v1016 = vrot.slane %v942, %v1015
    %v1017 = vlaneseq
    %v1018 = vshrl.u32 %v1017, 7
    %v1019 = vsub.s32 %v694, %v1018
    %v1020 = vrot.slane %v945, %v1019
    %v1021 = vsel %vm699, %v1020, %v1016
    %v1022 = vlaneseq
    %v1023 = vshrl.u32 %v1022, 7
    %v1024 = vsub.s32 %v689, %v1023
    %v1025 = vrot.slane %v948, %v1024
    %v1026 = vlaneseq
    %v1027 = vshrl.u32 %v1026, 7
    %v1028 = vsub.s32 %v694, %v1027
    %v1029 = vrot.slane %v951, %v1028
    %v1030 = vsel %vm699, %v1029, %v1025
    %v1031 = vlaneseq
    %v1032 = vshrl.u32 %v1031, 7
    %v1033 = vsub.s32 %v689, %v1032
    %v1034 = vrot.slane %v954, %v1033
    %v1035 = vlaneseq
    %v1036 = vshrl.u32 %v1035, 7
    %v1037 = vsub.s32 %v694, %v1036
    %v1038 = vrot.slane %v957, %v1037
    %v1039 = vsel %vm699, %v1038, %v1034
    %v1040 = vlaneseq
    %v1041 = vshrl.u32 %v1040, 7
    %v1042 = vsub.s32 %v689, %v1041
    %v1043 = vrot.slane %v960, %v1042
    %v1044 = vlaneseq
    %v1045 = vshrl.u32 %v1044, 7
    %v1046 = vsub.s32 %v694, %v1045
    %v1047 = vrot.slane %v963, %v1046
    %v1048 = vsel %vm699, %v1047, %v1043
    %v1049 = vlaneseq
    %v1050 = vshrl.u32 %v1049, 7
    %v1051 = vsub.s32 %v689, %v1050
    %v1052 = vrot.slane %v966, %v1051
    %v1053 = vlaneseq
    %v1054 = vshrl.u32 %v1053, 7
    %v1055 = vsub.s32 %v694, %v1054
    %v1056 = vrot.slane %v969, %v1055
    %v1057 = vsel %vm699, %v1056, %v1052
    %v1058 = vsel %vm764, %v1003, %v994
    %v1059 = vsel %vm766, %v1012, %v1058
    %v1060 = vsel %vm768, %v1021, %v1059
    %v1061 = vsel %vm770, %v1030, %v1060
    %v1062 = vsel %vm772, %v1039, %v1061
    %v1063 = vsel %vm774, %v1048, %v1062
    %v1064 = vsel %vm776, %v1057, %v1063
    %v1066 = vsel %vm671, %v1064, -1e+10
    %v1067 = vsel %vm780, %v1066, -inf
    %1068 = vmax.xlane.f32.xlu0 %v1067
    %v1069 = vpop.xlane.xlu0 %1068
    %v1070 = vsub.f32 %v1066, %v1069
    %v1071 = vmul.f32 %v1070, 1.442695
    %v1072 = vpow.pop %v1071
    %v1073 = vsel %vm780, %v1072, 0.0
    %1074 = vadd.xlane.f32.xlu0 %v1073
    %v1075 = vpop.xlane.xlu0 %1074
    %v1076 = vrcp.pop %v1075
    %v1077 = vmul.f32 %v1072, %v1076
    %v1078 = vlaneseq
    %v1079 = vshrl.u32 %v1078, 7
    %v1080 = vsub.s32 0, %v1079
    %v1081 = vrot.slane %v791, %v1080
    %1083 = vbcast.lane.b32.xlu0 %v1081, 256
    %v1084 = vpop.permute.xlu0 %1083
    %s1086 = sor.u32 256, 8
    %1087 = vbcast.lane.b32.xlu0 %v1081, %s1086
    %v1088 = vpop.permute.xlu0 %1087
    %v1089 = vlaneseq
    %v1090 = vshrl.u32 %v1089, 7
    %v1091 = vsub.s32 1, %v1090
    %v1092 = vrot.slane %v791, %v1091
    %1094 = vbcast.lane.b32.xlu0 %v1092, 256
    %v1095 = vpop.permute.xlu0 %1094
    %s1097 = sor.u32 256, 8
    %1098 = vbcast.lane.b32.xlu0 %v1092, %s1097
    %v1099 = vpop.permute.xlu0 %1098
    %v1100 = vlaneseq
    %v1101 = vshrl.u32 %v1100, 7
    %v1102 = vsub.s32 2, %v1101
    %v1103 = vrot.slane %v791, %v1102
    %1105 = vbcast.lane.b32.xlu0 %v1103, 256
    %v1106 = vpop.permute.xlu0 %1105
    %s1108 = sor.u32 256, 8
    %1109 = vbcast.lane.b32.xlu0 %v1103, %s1108
    %v1110 = vpop.permute.xlu0 %1109
    %v1111 = vlaneseq
    %v1112 = vshrl.u32 %v1111, 7
    %v1113 = vsub.s32 3, %v1112
    %v1114 = vrot.slane %v791, %v1113
    %1116 = vbcast.lane.b32.xlu0 %v1114, 256
    %v1117 = vpop.permute.xlu0 %1116
    %s1119 = sor.u32 256, 8
    %1120 = vbcast.lane.b32.xlu0 %v1114, %s1119
    %v1121 = vpop.permute.xlu0 %1120
    %v1122 = vlaneseq
    %v1123 = vshrl.u32 %v1122, 7
    %v1124 = vsub.s32 4, %v1123
    %v1125 = vrot.slane %v791, %v1124
    %1127 = vbcast.lane.b32.xlu0 %v1125, 256
    %v1128 = vpop.permute.xlu0 %1127
    %s1130 = sor.u32 256, 8
    %1131 = vbcast.lane.b32.xlu0 %v1125, %s1130
    %v1132 = vpop.permute.xlu0 %1131
    %v1133 = vlaneseq
    %v1134 = vshrl.u32 %v1133, 7
    %v1135 = vsub.s32 5, %v1134
    %v1136 = vrot.slane %v791, %v1135
    %1138 = vbcast.lane.b32.xlu0 %v1136, 256
    %v1139 = vpop.permute.xlu0 %1138
    %s1141 = sor.u32 256, 8
    %1142 = vbcast.lane.b32.xlu0 %v1136, %s1141
    %v1143 = vpop.permute.xlu0 %1142
    %v1144 = vlaneseq
    %v1145 = vshrl.u32 %v1144, 7
    %v1146 = vsub.s32 6, %v1145
    %v1147 = vrot.slane %v791, %v1146
    %1149 = vbcast.lane.b32.xlu0 %v1147, 256
    %v1150 = vpop.permute.xlu0 %1149
    %s1152 = sor.u32 256, 8
    %1153 = vbcast.lane.b32.xlu0 %v1147, %s1152
    %v1154 = vpop.permute.xlu0 %1153
    %v1155 = vlaneseq
    %v1156 = vshrl.u32 %v1155, 7
    %v1157 = vsub.s32 7, %v1156
    %v1158 = vrot.slane %v791, %v1157
    %1160 = vbcast.lane.b32.xlu0 %v1158, 256
    %v1161 = vpop.permute.xlu0 %1160
    %s1163 = sor.u32 256, 8
    %1164 = vbcast.lane.b32.xlu0 %v1158, %s1163
    %v1165 = vpop.permute.xlu0 %1164
    %v1166 = vmul.f32 %v1084, %v211
    %v1167 = vmul.f32 %v1088, %v212
    %v1168 = vmul.f32 %v1095, %v213
    %v1169 = vmul.f32 %v1099, %v214
    %v1170 = vmul.f32 %v1106, %v215
    %v1171 = vmul.f32 %v1110, %v216
    %v1172 = vmul.f32 %v1117, %v217
    %v1173 = vmul.f32 %v1121, %v218
    %v1174 = vmul.f32 %v1128, %v219
    %v1175 = vmul.f32 %v1132, %v220
    %v1176 = vmul.f32 %v1139, %v221
    %v1177 = vmul.f32 %v1143, %v222
    %v1178 = vmul.f32 %v1150, %v223
    %v1179 = vmul.f32 %v1154, %v224
    %v1180 = vmul.f32 %v1161, %v225
    %v1181 = vmul.f32 %v1165, %v226
    %v1182 = vsel %vm254, %v1166, 0.0
    %v1183 = vsel %vm254, %v1167, 0.0
    %v1184 = vadd.f32 %v1182, %v1183
    %v1185 = vrot.slane %v1184, 4
    %v1186 = vadd.f32 %v1184, %v1185
    %v1187 = vrot.slane %v1186, 2
    %v1188 = vadd.f32 %v1186, %v1187
    %v1189 = vrot.slane %v1188, 1
    %v1190 = vadd.f32 %v1188, %v1189
    %v1191 = vsel %vm254, %v1168, 0.0
    %v1192 = vsel %vm254, %v1169, 0.0
    %v1193 = vadd.f32 %v1191, %v1192
    %v1194 = vrot.slane %v1193, 4
    %v1195 = vadd.f32 %v1193, %v1194
    %v1196 = vrot.slane %v1195, 2
    %v1197 = vadd.f32 %v1195, %v1196
    %v1198 = vrot.slane %v1197, 1
    %v1199 = vadd.f32 %v1197, %v1198
    %v1200 = vsel %vm254, %v1170, 0.0
    %v1201 = vsel %vm254, %v1171, 0.0
    %v1202 = vadd.f32 %v1200, %v1201
    %v1203 = vrot.slane %v1202, 4
    %v1204 = vadd.f32 %v1202, %v1203
    %v1205 = vrot.slane %v1204, 2
    %v1206 = vadd.f32 %v1204, %v1205
    %v1207 = vrot.slane %v1206, 1
    %v1208 = vadd.f32 %v1206, %v1207
    %v1209 = vsel %vm254, %v1172, 0.0
    %v1210 = vsel %vm254, %v1173, 0.0
    %v1211 = vadd.f32 %v1209, %v1210
    %v1212 = vrot.slane %v1211, 4
    %v1213 = vadd.f32 %v1211, %v1212
    %v1214 = vrot.slane %v1213, 2
    %v1215 = vadd.f32 %v1213, %v1214
    %v1216 = vrot.slane %v1215, 1
    %v1217 = vadd.f32 %v1215, %v1216
    %v1218 = vsel %vm254, %v1174, 0.0
    %v1219 = vsel %vm254, %v1175, 0.0
    %v1220 = vadd.f32 %v1218, %v1219
    %v1221 = vrot.slane %v1220, 4
    %v1222 = vadd.f32 %v1220, %v1221
    %v1223 = vrot.slane %v1222, 2
    %v1224 = vadd.f32 %v1222, %v1223
    %v1225 = vrot.slane %v1224, 1
    %v1226 = vadd.f32 %v1224, %v1225
    %v1227 = vsel %vm254, %v1176, 0.0
    %v1228 = vsel %vm254, %v1177, 0.0
    %v1229 = vadd.f32 %v1227, %v1228
    %v1230 = vrot.slane %v1229, 4
    %v1231 = vadd.f32 %v1229, %v1230
    %v1232 = vrot.slane %v1231, 2
    %v1233 = vadd.f32 %v1231, %v1232
    %v1234 = vrot.slane %v1233, 1
    %v1235 = vadd.f32 %v1233, %v1234
    %v1236 = vsel %vm254, %v1178, 0.0
    %v1237 = vsel %vm254, %v1179, 0.0
    %v1238 = vadd.f32 %v1236, %v1237
    %v1239 = vrot.slane %v1238, 4
    %v1240 = vadd.f32 %v1238, %v1239
    %v1241 = vrot.slane %v1240, 2
    %v1242 = vadd.f32 %v1240, %v1241
    %v1243 = vrot.slane %v1242, 1
    %v1244 = vadd.f32 %v1242, %v1243
    %v1245 = vsel %vm254, %v1180, 0.0
    %v1246 = vsel %vm254, %v1181, 0.0
    %v1247 = vadd.f32 %v1245, %v1246
    %v1248 = vrot.slane %v1247, 4
    %v1249 = vadd.f32 %v1247, %v1248
    %v1250 = vrot.slane %v1249, 2
    %v1251 = vadd.f32 %v1249, %v1250
    %v1252 = vrot.slane %v1251, 1
    %v1253 = vadd.f32 %v1251, %v1252
    %v1254 = vpack.c.bf16 %v1190, %v1190
    %v1255 = vpack.c.bf16 %v1199, %v1199
    %v1256 = vpack.c.bf16 %v1208, %v1208
    %v1257 = vpack.c.bf16 %v1217, %v1217
    %v1258 = vpack.c.bf16 %v1226, %v1226
    %v1259 = vpack.c.bf16 %v1235, %v1235
    %v1260 = vpack.c.bf16 %v1244, %v1244
    %v1261 = vpack.c.bf16 %v1253, %v1253
    %v1262 = vld [vmem:[#allocation14] sm:$0xff]
    %v1263 = vld [vmem:[#allocation14 + $0x8] sm:$0xff]
    %v1264 = vld [vmem:[#allocation14 + $0x10] sm:$0xff]
    %v1265 = vld [vmem:[#allocation14 + $0x18] sm:$0xff]
    %v1274 = vunpack.c.l.b16 %v1254
    %v1275 = vunpack.c.l.b16 %v1255
    %v1276 = vunpack.c.l.b16 %v1256
    %v1277 = vunpack.c.l.b16 %v1257
    %v1278 = vunpack.c.l.b16 %v1258
    %v1279 = vunpack.c.l.b16 %v1259
    %v1280 = vunpack.c.l.b16 %v1260
    %v1281 = vunpack.c.l.b16 %v1261
    %v1282 = vsel %vm764, %v1275, %v1274
    %v1283 = vsel %vm766, %v1276, %v1282
    %v1284 = vsel %vm768, %v1277, %v1283
    %v1285 = vsel %vm770, %v1278, %v1284
    %v1286 = vsel %vm772, %v1279, %v1285
    %v1287 = vsel %vm774, %v1280, %v1286
    %v1288 = vsel %vm776, %v1281, %v1287
    %v1289 = vpack.c.b16 %v1288, %v1288
    %v1294 = vunpack.c.l.b16 %v1262
    %v1295 = vunpack.c.h.b16 %v1262
    %v1296 = vunpack.c.l.b16 %v1263
    %v1297 = vunpack.c.h.b16 %v1263
    %v1298 = vunpack.c.l.b16 %v1264
    %v1299 = vunpack.c.h.b16 %v1264
    %v1300 = vunpack.c.l.b16 %v1265
    %v1301 = vunpack.c.h.b16 %v1265
    %v1302 = vpack.c.b16 %v1296, %v1294
    %v1303 = vpack.c.b16 %v1297, %v1295
    %v1304 = vpack.c.b16 %v1300, %v1298
    %v1305 = vpack.c.b16 %v1301, %v1299
    %v1311 = vsel %vm254, %v1289, 0
    %1313 = vmatprep.subr.bf16.mxu0 %v1303
    %1314 = vmatpush1.bf16.msra.mxu0 %v1302
    %1315 = vmatprep.subr.bf16.mxu0 %v1305
    %1316 = vmatpush1.bf16.msra.mxu0 %v1304
    %1317 = vmatprep.subr.bf16.mxu0 0
    %1318 = vmatpush1.bf16.msra.mxu0 0
    %1319 = vmatprep.subr.bf16.mxu0 0
    %1320 = vmatpush1.bf16.msra.mxu0 0
    %1321 = vmatprep.subr.bf16.mxu0 0
    %1322 = vmatpush1.bf16.msra.mxu0 0
    %1323 = vmatprep.subr.bf16.mxu0 0
    %1324 = vmatpush1.bf16.msra.mxu0 0
    %1325 = vmatprep.subr.bf16.mxu0 0
    %1326 = vmatpush1.bf16.msra.mxu0 0
    %1327 = vmatprep.subr.bf16.mxu0 0
    %1328 = vmatpush1.bf16.msra.mxu0 0
    %1329 = vmatprep.subr.bf16.mxu0 0
    %1330 = vmatpush1.bf16.msra.mxu0 0
    %1331 = vmatprep.subr.bf16.mxu0 0
    %1332 = vmatpush1.bf16.msra.mxu0 0
    %1333 = vmatprep.subr.bf16.mxu0 0
    %1334 = vmatpush1.bf16.msra.mxu0 0
    %1335 = vmatprep.subr.bf16.mxu0 0
    %1336 = vmatpush1.bf16.msra.mxu0 0
    %1337 = vmatprep.subr.bf16.mxu0 0
    %1338 = vmatpush1.bf16.msra.mxu0 0
    %1339 = vmatprep.subr.bf16.mxu0 0
    %1340 = vmatpush1.bf16.msra.mxu0 0
    %1341 = vmatprep.subr.bf16.mxu0 0
    %1342 = vmatpush1.bf16.msra.mxu0 0
    %1343 = vmatprep.subr.bf16.mxu0 0
    %1344 = vmatpush1.bf16.msra.mxu0 0
    %1345 = vmatprep.mubr.bf16.mxu0 0
    %1346 = vmatmul.mubr.bf16.gmra.mrb[0].mxu0 %v1311
    %v1347 = vpop.f32.mrb[0].mxu0
    %v1348 = vadd.f32 0.0, %v1347
    %v1349 = vpop.f32.mrb[0].mxu0
    %v1350 = vadd.f32 0.0, %v1349
    %v1351 = vpop.f32.mrb[0].mxu0
    %v1352 = vpop.f32.mrb[0].mxu0
    %1353 = vdwg.mxu0
    %v1354 = vld [vmem:[%s8] sm:$0xff]
    %v1355 = vld [vmem:[%s8 + $0x8] sm:$0xff]
    %v1358 = vunpack.c.l.b16 %v1354
    %v1359 = vunpack.c.h.b16 %v1354
    %v1360 = vunpack.c.l.b16 %v1355
    %v1361 = vunpack.c.h.b16 %v1355
    %v1362 = vpack.c.b16 %v1360, %v1358
    %v1363 = vpack.c.b16 %v1361, %v1359
    %v1367 = vsel %vm780, %v228, 0
    %1369 = vmatprep.subr.bf16.mxu0 %v1363
    %1370 = vmatpush1.bf16.msra.mxu0 %v1362
    %1371 = vmatprep.subr.bf16.mxu0 0
    %1372 = vmatpush1.bf16.msra.mxu0 0
    %1373 = vmatprep.subr.bf16.mxu0 0
    %1374 = vmatpush1.bf16.msra.mxu0 0
    %1375 = vmatprep.subr.bf16.mxu0 0
    %1376 = vmatpush1.bf16.msra.mxu0 0
    %1377 = vmatprep.subr.bf16.mxu0 0
    %1378 = vmatpush1.bf16.msra.mxu0 0
    %1379 = vmatprep.subr.bf16.mxu0 0
    %1380 = vmatpush1.bf16.msra.mxu0 0
    %1381 = vmatprep.subr.bf16.mxu0 0
    %1382 = vmatpush1.bf16.msra.mxu0 0
    %1383 = vmatprep.subr.bf16.mxu0 0
    %1384 = vmatpush1.bf16.msra.mxu0 0
    %1385 = vmatprep.subr.bf16.mxu0 0
    %1386 = vmatpush1.bf16.msra.mxu0 0
    %1387 = vmatprep.subr.bf16.mxu0 0
    %1388 = vmatpush1.bf16.msra.mxu0 0
    %1389 = vmatprep.subr.bf16.mxu0 0
    %1390 = vmatpush1.bf16.msra.mxu0 0
    %1391 = vmatprep.subr.bf16.mxu0 0
    %1392 = vmatpush1.bf16.msra.mxu0 0
    %1393 = vmatprep.subr.bf16.mxu0 0
    %1394 = vmatpush1.bf16.msra.mxu0 0
    %1395 = vmatprep.subr.bf16.mxu0 0
    %1396 = vmatpush1.bf16.msra.mxu0 0
    %1397 = vmatprep.subr.bf16.mxu0 0
    %1398 = vmatpush1.bf16.msra.mxu0 0
    %1399 = vmatprep.subr.bf16.mxu0 0
    %1400 = vmatpush1.bf16.msra.mxu0 0
    %1401 = vmatprep.mubr.bf16.mxu0 0
    %1402 = vmatmul.mubr.bf16.gmra.mrb[0].mxu0 %v1367
    %v1403 = vpop.f32.mrb[0].mxu0
    %v1404 = vadd.f32 0.0, %v1403
    %v1405 = vpop.f32.mrb[0].mxu0
    %v1406 = vadd.f32 0.0, %v1405
    %v1407 = vpop.f32.mrb[0].mxu0
    %v1408 = vpop.f32.mrb[0].mxu0
    %1409 = vdwg.mxu0
    %1411 = vrot.lane.b32.xlu0 %v295, 64
    %v1412 = vpop.permute.xlu0 %1411
    %v1414 = vadd.f32 %v1348, %v1412
    %s1415 = sld [smem:[#allocation2]]
    %v1416 = vstv %s1415
    %v1417 = vadd.f32 %v1414, %v1416
    %v1418 = vxor.u32 %v1417, 2147483648
    %v1419 = vmul.f32 %v1418, 1.442695
    %v1420 = vpow.pop %v1419
    %v1421 = vadd.f32 %v1420, 1.0
    %v1422 = vrcp.pop %v1421
    %v1423 = vmul.f32 1.0, %v1422
    %v1424 = vadd.f32 %v1348, %v1404
    %v1425 = vld [vmem:[%s16] sm:$0x1]
    %v1427 = vlaneseq
    %v1428 = vshrl.u32 %v1427, 7
    %v1429 = vsub.s32 0, %v1428
    %v1430 = vrot.slane %v1425, %v1429
    %v1432 = vadd.f32 %v1424, %v1430
    %v1433 = vpack.c.bf16 %v208, %v208
    %v1434 = vld [vmem:[#allocation17] sm:$0xf]
    %v1435 = vld [vmem:[#allocation17 + $0x4] sm:$0xf]
    %v1436 = vld [vmem:[#allocation17 + $0x8] sm:$0xf]
    %v1437 = vld [vmem:[#allocation17 + $0xc] sm:$0xf]
    %v1438 = vld [vmem:[%s17] sm:$0x1]
    %v1440 = vlaneseq
    %v1441 = vshrl.u32 %v1440, 7
    %v1442 = vsub.s32 0, %v1441
    %v1443 = vrot.slane %v1438, %v1442
    %v1449 = vunpack.c.l.b16 %v1434
    %v1450 = vunpack.c.l.b16 %v1435
    %v1451 = vunpack.c.l.b16 %v1436
    %v1452 = vunpack.c.l.b16 %v1437
    %v1453 = vpack.c.b16 %v1450, %v1449
    %v1454 = vpack.c.b16 %v1452, %v1451
    %v1458 = vsel %vm254, %v1433, 0
    %1460 = vmatprep.subr.bf16.mxu0 0
    %1461 = vmatpush1.bf16.msra.mxu0 %v1453
    %1462 = vmatprep.subr.bf16.mxu0 0
    %1463 = vmatpush1.bf16.msra.mxu0 %v1454
    %1464 = vmatprep.subr.bf16.mxu0 0
    %1465 = vmatpush1.bf16.msra.mxu0 0
    %1466 = vmatprep.subr.bf16.mxu0 0
    %1467 = vmatpush1.bf16.msra.mxu0 0
    %1468 = vmatprep.subr.bf16.mxu0 0
    %1469 = vmatpush1.bf16.msra.mxu0 0
    %1470 = vmatprep.subr.bf16.mxu0 0
    %1471 = vmatpush1.bf16.msra.mxu0 0
    %1472 = vmatprep.subr.bf16.mxu0 0
    %1473 = vmatpush1.bf16.msra.mxu0 0
    %1474 = vmatprep.subr.bf16.mxu0 0
    %1475 = vmatpush1.bf16.msra.mxu0 0
    %1476 = vmatprep.subr.bf16.mxu0 0
    %1477 = vmatpush1.bf16.msra.mxu0 0
    %1478 = vmatprep.subr.bf16.mxu0 0
    %1479 = vmatpush1.bf16.msra.mxu0 0
    %1480 = vmatprep.subr.bf16.mxu0 0
    %1481 = vmatpush1.bf16.msra.mxu0 0
    %1482 = vmatprep.subr.bf16.mxu0 0
    %1483 = vmatpush1.bf16.msra.mxu0 0
    %1484 = vmatprep.subr.bf16.mxu0 0
    %1485 = vmatpush1.bf16.msra.mxu0 0
    %1486 = vmatprep.subr.bf16.mxu0 0
    %1487 = vmatpush1.bf16.msra.mxu0 0
    %1488 = vmatprep.subr.bf16.mxu0 0
    %1489 = vmatpush1.bf16.msra.mxu0 0
    %1490 = vmatprep.subr.bf16.mxu0 0
    %1491 = vmatpush1.bf16.msra.mxu0 0
    %1492 = vmatprep.mubr.bf16.mxu0 0
    %1493 = vmatmul.mubr.bf16.gmra.mrb[0].mxu0 %v1458
    %v1494 = vpop.f32.mrb[0].mxu0
    %v1495 = vadd.f32 %v1443, %v1494
    %v1496 = vpop.f32.mrb[0].mxu0
    %v1497 = vpop.f32.mrb[0].mxu0
    %v1498 = vpop.f32.mrb[0].mxu0
    %1499 = vdwg.mxu0
    %v1500 = vadd.f32 %v1432, %v1495
    %v1501 = vxor.u32 %v1500, 2147483648
    %v1502 = vmul.f32 %v1501, 1.442695
    %v1503 = vpow.pop %v1502
    %v1504 = vadd.f32 %v1503, 1.0
    %v1505 = vrcp.pop %v1504
    %v1506 = vmul.f32 1.0, %v1505
    %1508 = vrot.lane.b32.xlu0 %v1495, 64
    %v1509 = vpop.permute.xlu0 %1508
    %v1511 = vmul.f32 %v1506, %v1509
    %1513 = vrot.lane.b32.xlu0 %v1511, 64
    %v1514 = vpop.permute.xlu0 %1513
    %v1516 = vadd.f32 %v1432, %v1514
    %v1517 = vtanh.pop %v1516
    %v1518 = vsub.f32 1.0, %v1506
    %1520 = vrot.lane.b32.xlu0 %v1517, 96
    %v1521 = vpop.permute.xlu0 %1520
    %v1523 = vmul.f32 %v1518, %v1521
    %1525 = vrot.lane.b32.xlu0 %v208, 32
    %v1526 = vpop.permute.xlu0 %1525
    %v1528 = vmul.f32 %v1506, %v1526
    %v1529 = vadd.f32 %v1523, %v1528
    %v1530 = vpack.c.bf16 %v1529, %v1529
    %v1531 = vld [vmem:[#allocation15] sm:$0xf]
    %v1532 = vld [vmem:[#allocation15 + $0x4] sm:$0xf]
    %v1533 = vld [vmem:[#allocation15 + $0x8] sm:$0xf]
    %v1534 = vld [vmem:[#allocation15 + $0xc] sm:$0xf]
    %v1535 = vld [vmem:[%s18] sm:$0x1]
    %v1537 = vlaneseq
    %v1538 = vshrl.u32 %v1537, 7
    %v1539 = vsub.s32 0, %v1538
    %v1540 = vrot.slane %v1535, %v1539
    %1543 = vrot.lane.b32.xlu0 %v1530, 96
    %v1544 = vpop.permute.xlu0 %1543
    %v1549 = vunpack.c.l.b16 %v1531
    %v1550 = vunpack.c.l.b16 %v1532
    %v1551 = vunpack.c.l.b16 %v1533
    %v1552 = vunpack.c.l.b16 %v1534
    %v1553 = vpack.c.b16 %v1550, %v1549
    %v1554 = vpack.c.b16 %v1552, %v1551
    %v1558 = vsel %vm254, %v1544, 0
    %1560 = vmatprep.subr.bf16.mxu0 0
    %1561 = vmatpush1.bf16.msra.mxu0 %v1553
    %1562 = vmatprep.subr.bf16.mxu0 0
    %1563 = vmatpush1.bf16.msra.mxu0 %v1554
    %1564 = vmatprep.subr.bf16.mxu0 0
    %1565 = vmatpush1.bf16.msra.mxu0 0
    %1566 = vmatprep.subr.bf16.mxu0 0
    %1567 = vmatpush1.bf16.msra.mxu0 0
    %1568 = vmatprep.subr.bf16.mxu0 0
    %1569 = vmatpush1.bf16.msra.mxu0 0
    %1570 = vmatprep.subr.bf16.mxu0 0
    %1571 = vmatpush1.bf16.msra.mxu0 0
    %1572 = vmatprep.subr.bf16.mxu0 0
    %1573 = vmatpush1.bf16.msra.mxu0 0
    %1574 = vmatprep.subr.bf16.mxu0 0
    %1575 = vmatpush1.bf16.msra.mxu0 0
    %1576 = vmatprep.subr.bf16.mxu0 0
    %1577 = vmatpush1.bf16.msra.mxu0 0
    %1578 = vmatprep.subr.bf16.mxu0 0
    %1579 = vmatpush1.bf16.msra.mxu0 0
    %1580 = vmatprep.subr.bf16.mxu0 0
    %1581 = vmatpush1.bf16.msra.mxu0 0
    %1582 = vmatprep.subr.bf16.mxu0 0
    %1583 = vmatpush1.bf16.msra.mxu0 0
    %1584 = vmatprep.subr.bf16.mxu0 0
    %1585 = vmatpush1.bf16.msra.mxu0 0
    %1586 = vmatprep.subr.bf16.mxu0 0
    %1587 = vmatpush1.bf16.msra.mxu0 0
    %1588 = vmatprep.subr.bf16.mxu0 0
    %1589 = vmatpush1.bf16.msra.mxu0 0
    %1590 = vmatprep.subr.bf16.mxu0 0
    %1591 = vmatpush1.bf16.msra.mxu0 0
    %1592 = vmatprep.mubr.bf16.mxu0 0
    %1593 = vmatmul.mubr.bf16.gmra.mrb[0].mxu0 %v1558
    %v1594 = vpop.f32.mrb[0].mxu0
    %v1595 = vadd.f32 %v1540, %v1594
    %v1596 = vpop.f32.mrb[0].mxu0
    %v1597 = vpop.f32.mrb[0].mxu0
    %v1598 = vpop.f32.mrb[0].mxu0
    %1599 = vdwg.mxu0
    %1601 = vrot.lane.b32.xlu0 %v308, 64
    %v1602 = vpop.permute.xlu0 %1601
    %v1604 = vadd.f32 %v1595, %v1602
    %v1605 = vxor.u32 %v1604, 2147483648
    %v1606 = vmul.f32 %v1605, 1.442695
    %v1607 = vpow.pop %v1606
    %v1608 = vadd.f32 %v1607, 1.0
    %v1609 = vrcp.pop %v1608
    %v1610 = vmul.f32 1.0, %v1609
    %v1611 = vmul.f32 %v1610, %v309
    %1613 = vrot.lane.b32.xlu0 %v1611, 64
    %v1614 = vpop.permute.xlu0 %1613
    %v1616 = vadd.f32 %v1595, %v1614
    %v1617 = vtanh.pop %v1616
    %v1618 = vsub.f32 1.0, %v1610
    %1620 = vrot.lane.b32.xlu0 %v1617, 96
    %v1621 = vpop.permute.xlu0 %1620
    %v1623 = vmul.f32 %v1618, %v1621
    %1625 = vrot.lane.b32.xlu0 %v210, 32
    %v1626 = vpop.permute.xlu0 %1625
    %v1628 = vmul.f32 %v1610, %v1626
    %v1629 = vadd.f32 %v1623, %v1628
    %v1630 = vpack.c.bf16 %v1629, %v1629
    %v1631 = vld [vmem:[#allocation18] sm:$0xf]
    %v1632 = vld [vmem:[#allocation18 + $0x4] sm:$0xf]
    %v1633 = vld [vmem:[#allocation18 + $0x8] sm:$0xf]
    %v1634 = vld [vmem:[#allocation18 + $0xc] sm:$0xf]
    %1636 = vrot.lane.b32.xlu0 %v1630, 96
    %v1637 = vpop.permute.xlu0 %1636
    %v1642 = vunpack.c.l.b16 %v1631
    %v1643 = vunpack.c.l.b16 %v1632
    %v1644 = vunpack.c.l.b16 %v1633
    %v1645 = vunpack.c.l.b16 %v1634
    %v1646 = vpack.c.b16 %v1643, %v1642
    %v1647 = vpack.c.b16 %v1645, %v1644
    %1652 = vrot.lane.b32.xlu0 %v1348, 31
    %v1653 = vpop.permute.xlu0 %1652
    %1654 = vrot.lane.b32.xlu0 %v1350, 31
    %v1655 = vpop.permute.xlu0 %1654
    %vm1656 = vcmask 252928
    %v1657 = vsel %vm1656, %v1653, %v1655
    %v1660 = vsel %vm254, %v1637, 0
    %1662 = vmatprep.subr.bf16.mxu0 0
    %1663 = vmatpush1.bf16.msra.mxu0 %v1646
    %1664 = vmatprep.subr.bf16.mxu0 0
    %1665 = vmatpush1.bf16.msra.mxu0 %v1647
    %1666 = vmatprep.subr.bf16.mxu0 0
    %1667 = vmatpush1.bf16.msra.mxu0 0
    %1668 = vmatprep.subr.bf16.mxu0 0
    %1669 = vmatpush1.bf16.msra.mxu0 0
    %1670 = vmatprep.subr.bf16.mxu0 0
    %1671 = vmatpush1.bf16.msra.mxu0 0
    %1672 = vmatprep.subr.bf16.mxu0 0
    %1673 = vmatpush1.bf16.msra.mxu0 0
    %1674 = vmatprep.subr.bf16.mxu0 0
    %1675 = vmatpush1.bf16.msra.mxu0 0
    %1676 = vmatprep.subr.bf16.mxu0 0
    %1677 = vmatpush1.bf16.msra.mxu0 0
    %1678 = vmatprep.subr.bf16.mxu0 0
    %1679 = vmatpush1.bf16.msra.mxu0 0
    %1680 = vmatprep.subr.bf16.mxu0 0
    %1681 = vmatpush1.bf16.msra.mxu0 0
    %1682 = vmatprep.subr.bf16.mxu0 0
    %1683 = vmatpush1.bf16.msra.mxu0 0
    %1684 = vmatprep.subr.bf16.mxu0 0
    %1685 = vmatpush1.bf16.msra.mxu0 0
    %1686 = vmatprep.subr.bf16.mxu0 0
    %1687 = vmatpush1.bf16.msra.mxu0 0
    %1688 = vmatprep.subr.bf16.mxu0 0
    %1689 = vmatpush1.bf16.msra.mxu0 0
    %1690 = vmatprep.subr.bf16.mxu0 0
    %1691 = vmatpush1.bf16.msra.mxu0 0
    %1692 = vmatprep.subr.bf16.mxu0 0
    %1693 = vmatpush1.bf16.msra.mxu0 0
    %1694 = vmatprep.mubr.bf16.mxu0 0
    %1695 = vmatmul.mubr.bf16.gmra.mrb[0].mxu0 %v1660
    %v1696 = vpop.f32.mrb[0].mxu0
    %v1697 = vadd.f32 %v1657, %v1696
    %v1698 = vpop.f32.mrb[0].mxu0
    %v1699 = vpop.f32.mrb[0].mxu0
    %v1700 = vpop.f32.mrb[0].mxu0
    %1701 = vdwg.mxu0
    %1704 = vrot.lane.b32.xlu0 %v1404, 32
    %v1705 = vpop.permute.xlu0 %1704
    %1706 = vrot.lane.b32.xlu0 %v1406, 32
    %v1707 = vpop.permute.xlu0 %1706
    %v1708 = vsel %vm254, %v1705, %v1707
    %v1710 = vadd.f32 %v1697, %v1708
    %v1711 = vld [vmem:[%s20] sm:$0x1]
    %v1713 = vlaneseq
    %v1714 = vshrl.u32 %v1713, 7
    %v1715 = vsub.s32 0, %v1714
    %v1716 = vrot.slane %v1711, %v1715
    %v1718 = vadd.f32 %v1710, %v1716
    %v1719 = vld [vmem:[#allocation3] sm:$0xff]
    %1720 = vset.pattern.permute.xlu0 0
    %1721 = vperm.xlu0 %1720, %v1719
    %v1722 = vpop.permute.xlu0 %1721
    %vm1723 = vcmp.eq.s32.totalorder %v1722, %v689
    %v1724 = vsel %vm1723, 1, 0
    %v1725 = vcvt.s32.f32 %v1724
    %1727 = vset.pattern.permute.xlu0 0
    %1728 = vperm.xlu0 %1727, %v1077
    %v1729 = vpop.permute.xlu0 %1728
    %v1731 = vmul.f32 %v1729, %v1725
    %v1732 = vadd.f32 %v1731, 0.0
    %1733 = vset.pattern.permute.xlu0 1
    %1734 = vperm.xlu0 %1733, %v1719
    %v1735 = vpop.permute.xlu0 %1734
    %vm1736 = vcmp.eq.s32.totalorder %v1735, %v689
    %v1737 = vsel %vm1736, 1, 0
    %v1738 = vcvt.s32.f32 %v1737
    %1739 = vset.pattern.permute.xlu0 1
    %1740 = vperm.xlu0 %1739, %v1077
    %v1741 = vpop.permute.xlu0 %1740
    %v1743 = vmul.f32 %v1741, %v1738
    %v1744 = vadd.f32 %v1732, %v1743
    %1745 = vset.pattern.permute.xlu0 2
    %1746 = vperm.xlu0 %1745, %v1719
    %v1747 = vpop.permute.xlu0 %1746
    %vm1748 = vcmp.eq.s32.totalorder %v1747, %v689
    %v1749 = vsel %vm1748, 1, 0
    %v1750 = vcvt.s32.f32 %v1749
    %1751 = vset.pattern.permute.xlu0 2
    %1752 = vperm.xlu0 %1751, %v1077
    %v1753 = vpop.permute.xlu0 %1752
    %v1755 = vmul.f32 %v1753, %v1750
    %v1756 = vadd.f32 %v1744, %v1755
    %1757 = vset.pattern.permute.xlu0 3
    %1758 = vperm.xlu0 %1757, %v1719
    %v1759 = vpop.permute.xlu0 %1758
    %vm1760 = vcmp.eq.s32.totalorder %v1759, %v689
    %v1761 = vsel %vm1760, 1, 0
    %v1762 = vcvt.s32.f32 %v1761
    %1763 = vset.pattern.permute.xlu0 3
    %1764 = vperm.xlu0 %1763, %v1077
    %v1765 = vpop.permute.xlu0 %1764
    %v1767 = vmul.f32 %v1765, %v1762
    %v1768 = vadd.f32 %v1756, %v1767
    %1769 = vset.pattern.permute.xlu0 4
    %1770 = vperm.xlu0 %1769, %v1719
    %v1771 = vpop.permute.xlu0 %1770
    %vm1772 = vcmp.eq.s32.totalorder %v1771, %v689
    %v1773 = vsel %vm1772, 1, 0
    %v1774 = vcvt.s32.f32 %v1773
    %1775 = vset.pattern.permute.xlu0 4
    %1776 = vperm.xlu0 %1775, %v1077
    %v1777 = vpop.permute.xlu0 %1776
    %v1779 = vmul.f32 %v1777, %v1774
    %v1780 = vadd.f32 %v1768, %v1779
    %1781 = vset.pattern.permute.xlu0 5
    %1782 = vperm.xlu0 %1781, %v1719
    %v1783 = vpop.permute.xlu0 %1782
    %vm1784 = vcmp.eq.s32.totalorder %v1783, %v689
    %v1785 = vsel %vm1784, 1, 0
    %v1786 = vcvt.s32.f32 %v1785
    %1787 = vset.pattern.permute.xlu0 5
    %1788 = vperm.xlu0 %1787, %v1077
    %v1789 = vpop.permute.xlu0 %1788
    %v1791 = vmul.f32 %v1789, %v1786
    %v1792 = vadd.f32 %v1780, %v1791
    %1793 = vset.pattern.permute.xlu0 6
    %1794 = vperm.xlu0 %1793, %v1719
    %v1795 = vpop.permute.xlu0 %1794
    %vm1796 = vcmp.eq.s32.totalorder %v1795, %v689
    %v1797 = vsel %vm1796, 1, 0
    %v1798 = vcvt.s32.f32 %v1797
    %1799 = vset.pattern.permute.xlu0 6
    %1800 = vperm.xlu0 %1799, %v1077
    %v1801 = vpop.permute.xlu0 %1800
    %v1803 = vmul.f32 %v1801, %v1798
    %v1804 = vadd.f32 %v1792, %v1803
    %1805 = vset.pattern.permute.xlu0 7
    %1806 = vperm.xlu0 %1805, %v1719
    %v1807 = vpop.permute.xlu0 %1806
    %vm1808 = vcmp.eq.s32.totalorder %v1807, %v689
    %v1809 = vsel %vm1808, 1, 0
    %v1810 = vcvt.s32.f32 %v1809
    %1811 = vset.pattern.permute.xlu0 7
    %1812 = vperm.xlu0 %1811, %v1077
    %v1813 = vpop.permute.xlu0 %1812
    %v1815 = vmul.f32 %v1813, %v1810
    %v1816 = vadd.f32 %v1804, %v1815
    %1817 = vset.pattern.permute.xlu0 8
    %1818 = vperm.xlu0 %1817, %v1719
    %v1819 = vpop.permute.xlu0 %1818
    %vm1820 = vcmp.eq.s32.totalorder %v1819, %v689
    %v1821 = vsel %vm1820, 1, 0
    %v1822 = vcvt.s32.f32 %v1821
    %1823 = vset.pattern.permute.xlu0 8
    %1824 = vperm.xlu0 %1823, %v1077
    %v1825 = vpop.permute.xlu0 %1824
    %v1827 = vmul.f32 %v1825, %v1822
    %v1828 = vadd.f32 %v1816, %v1827
    %1829 = vset.pattern.permute.xlu0 9
    %1830 = vperm.xlu0 %1829, %v1719
    %v1831 = vpop.permute.xlu0 %1830
    %vm1832 = vcmp.eq.s32.totalorder %v1831, %v689
    %v1833 = vsel %vm1832, 1, 0
    %v1834 = vcvt.s32.f32 %v1833
    %1835 = vset.pattern.permute.xlu0 9
    %1836 = vperm.xlu0 %1835, %v1077
    %v1837 = vpop.permute.xlu0 %1836
    %v1839 = vmul.f32 %v1837, %v1834
    %v1840 = vadd.f32 %v1828, %v1839
    %1841 = vset.pattern.permute.xlu0 10
    %1842 = vperm.xlu0 %1841, %v1719
    %v1843 = vpop.permute.xlu0 %1842
    %vm1844 = vcmp.eq.s32.totalorder %v1843, %v689
    %v1845 = vsel %vm1844, 1, 0
    %v1846 = vcvt.s32.f32 %v1845
    %1847 = vset.pattern.permute.xlu0 10
    %1848 = vperm.xlu0 %1847, %v1077
    %v1849 = vpop.permute.xlu0 %1848
    %v1851 = vmul.f32 %v1849, %v1846
    %v1852 = vadd.f32 %v1840, %v1851
    %1853 = vset.pattern.permute.xlu0 11
    %1854 = vperm.xlu0 %1853, %v1719
    %v1855 = vpop.permute.xlu0 %1854
    %vm1856 = vcmp.eq.s32.totalorder %v1855, %v689
    %v1857 = vsel %vm1856, 1, 0
    %v1858 = vcvt.s32.f32 %v1857
    %1859 = vset.pattern.permute.xlu0 11
    %1860 = vperm.xlu0 %1859, %v1077
    %v1861 = vpop.permute.xlu0 %1860
    %v1863 = vmul.f32 %v1861, %v1858
    %v1864 = vadd.f32 %v1852, %v1863
    %1865 = vset.pattern.permute.xlu0 12
    %1866 = vperm.xlu0 %1865, %v1719
    %v1867 = vpop.permute.xlu0 %1866
    %vm1868 = vcmp.eq.s32.totalorder %v1867, %v689
    %v1869 = vsel %vm1868, 1, 0
    %v1870 = vcvt.s32.f32 %v1869
    %1871 = vset.pattern.permute.xlu0 12
    %1872 = vperm.xlu0 %1871, %v1077
    %v1873 = vpop.permute.xlu0 %1872
    %v1875 = vmul.f32 %v1873, %v1870
    %v1876 = vadd.f32 %v1864, %v1875
    %1877 = vset.pattern.permute.xlu0 13
    %1878 = vperm.xlu0 %1877, %v1719
    %v1879 = vpop.permute.xlu0 %1878
    %vm1880 = vcmp.eq.s32.totalorder %v1879, %v689
    %v1881 = vsel %vm1880, 1, 0
    %v1882 = vcvt.s32.f32 %v1881
    %1883 = vset.pattern.permute.xlu0 13
    %1884 = vperm.xlu0 %1883, %v1077
    %v1885 = vpop.permute.xlu0 %1884
    %v1887 = vmul.f32 %v1885, %v1882
    %v1888 = vadd.f32 %v1876, %v1887
    %1889 = vset.pattern.permute.xlu0 14
    %1890 = vperm.xlu0 %1889, %v1719
    %v1891 = vpop.permute.xlu0 %1890
    %vm1892 = vcmp.eq.s32.totalorder %v1891, %v689
    %v1893 = vsel %vm1892, 1, 0
    %v1894 = vcvt.s32.f32 %v1893
    %1895 = vset.pattern.permute.xlu0 14
    %1896 = vperm.xlu0 %1895, %v1077
    %v1897 = vpop.permute.xlu0 %1896
    %v1899 = vmul.f32 %v1897, %v1894
    %v1900 = vadd.f32 %v1888, %v1899
    %1901 = vset.pattern.permute.xlu0 15
    %1902 = vperm.xlu0 %1901, %v1719
    %v1903 = vpop.permute.xlu0 %1902
    %vm1904 = vcmp.eq.s32.totalorder %v1903, %v689
    %v1905 = vsel %vm1904, 1, 0
    %v1906 = vcvt.s32.f32 %v1905
    %1907 = vset.pattern.permute.xlu0 15
    %1908 = vperm.xlu0 %1907, %v1077
    %v1909 = vpop.permute.xlu0 %1908
    %v1911 = vmul.f32 %v1909, %v1906
    %v1912 = vadd.f32 %v1900, %v1911
    %v1913 = vsub.f32 1.0, %v1423
    %1915 = vset.pattern.permute.xlu0 96
    %1916 = vperm.xlu0 %1915, %v1913
    %v1917 = vpop.permute.xlu0 %1916
    %v1919 = vmul.f32 %v1718, %v1917
    %1921 = vset.pattern.permute.xlu0 96
    %1922 = vperm.xlu0 %1921, %v1423
    %v1923 = vpop.permute.xlu0 %1922
    %v1925 = vmul.f32 %v1912, %v1923
    %v1926 = vadd.f32 %v1919, %v1925
    %vm1927 = vcmask 523264
    %1928 = vst.msk [vmem:[#allocation20] sm:$0xff] %vm1927, %v1926
    %1930 = vrot.lane.b32.xlu0 %v1529, 96
    %v1931 = vpop.permute.xlu0 %1930
    %1933 = vst.msk [vmem:[#allocation21] sm:$0xff] %vm254, %v1931
    %1935 = vrot.lane.b32.xlu0 %v1629, 96
    %v1936 = vpop.permute.xlu0 %1935
    %s1938 = scalar_lea.vmem [#allocation21], 8
    %1939 = vst.msk [vmem:[%s1938] sm:$0xff] %vm254, %v1936
    %1940 = vst.msk [vmem:[#allocation23] sm:$0xff] %vm780, %v791
    // Predicated region
    $region130: #{tpu_custom_call.1} parent=1 // pred_check
      _
    $region131: #{tpu_custom_call.1} parent=1 // pred_check_branch
      %1942 = sbr.rel (0) target = $region133
    $region132: #{tpu_custom_call.1} parent=1 // pred_region
      %s1944 = ssub.s32 128, 128
      %1945 = vsyncadd [#allocation5], %s1944
      %s1947 = sshll.u32 [#allocation20], 4
      %s1948 = int_to_ptr.vmem [resolvable:$true] %s1947
      %1950 = dma.vmem_to_hbm [thread:$0]  %s1948, 128, %s22, [#allocation5]
    $region133: #{tpu_custom_call.1} parent=1 // pred_fallthru
      _
    // Predicated region
    $region134: #{tpu_custom_call.1} parent=1 // pred_check
      _
    $region135: #{tpu_custom_call.1} parent=1 // pred_check_branch
      %1952 = sbr.rel (0) target = $region137
    $region136: #{tpu_custom_call.1} parent=1 // pred_region
      %s1954 = ssub.s32 256, 256
      %1955 = vsyncadd [#allocation22], %s1954
      %s1956 = sshll.u32 [#allocation21], 4
      %s1957 = int_to_ptr.vmem [resolvable:$true] %s1956
      %1962 = dma.vmem_to_hbm [thread:$0]  %s1957, 256, %s23, [#allocation22], 128, 128, 8
    $region137: #{tpu_custom_call.1} parent=1 // pred_fallthru
      _
    // Predicated region
    $region138: #{tpu_custom_call.1} parent=1 // pred_check
      _
    $region139: #{tpu_custom_call.1} parent=1 // pred_check_branch
      %1964 = sbr.rel (0) target = $region141
    $region140: #{tpu_custom_call.1} parent=1 // pred_region
      %s1966 = ssub.s32 128, 128
      %1967 = vsyncadd [#allocation22], %s1966
      %s1969 = sshll.u32 [#allocation23], 4
      %s1970 = int_to_ptr.vmem [resolvable:$true] %s1969
      %1972 = dma.vmem_to_hbm [thread:$0]  %s1970, 128, %s24, [#allocation22]
    $region141: #{tpu_custom_call.1} parent=1 // pred_fallthru
      _
    // Predicated region
    $region142: #{tpu_custom_call.1} parent=1 // pred_check
      _
    $region143: #{tpu_custom_call.1} parent=1 // pred_check_branch
      %1974 = sbr.rel (0) target = $region145
    $region144: #{tpu_custom_call.1} parent=1 // pred_region
      %1975 = dma.done [#allocation5], 128
    $region145: #{tpu_custom_call.1} parent=1 // pred_fallthru
      _
    // Predicated region
    $region146: #{tpu_custom_call.1} parent=1 // pred_check
      _
    $region147: #{tpu_custom_call.1} parent=1 // pred_check_branch
      %1977 = sbr.rel (0) target = $region149
    $region148: #{tpu_custom_call.1} parent=1 // pred_region
      %1978 = dma.done [#allocation22], 256
    $region149: #{tpu_custom_call.1} parent=1 // pred_fallthru
      _
    // Predicated region
    $region150: #{tpu_custom_call.1} parent=1 // pred_check
      _
    $region151: #{tpu_custom_call.1} parent=1 // pred_check_branch
      %1980 = sbr.rel (0) target = $region153
    $region152: #{tpu_custom_call.1} parent=1 // pred_region
      %1981 = dma.done [#allocation22], 128
    $region153: #{tpu_custom_call.1} parent=1 // pred_fallthru
      _
    %1982 = vsyncpa [#allocation4], 1
    %1983 = vsyncpa [#allocation7], 1
    %1984 = vsyncpa [#allocation10], 1
    %1985 = vsyncpa [#allocation13], 1
    %1986 = vsyncpa [#allocation16], 1
    %1987 = vsyncpa [#allocation19], 1
    %1988 = vsyncpa [#allocation5], 1
    %1989 = vsyncpa [#allocation22], 1

</llo_original>
